<compile_context>
chip_gen: v5e
topology: v5e:2x2
jax: 0.10.0
libtpu: 0.0.40
codegen_flags: <defaults>
</compile_context>

<pallas_src>
import functools

import jax
import jax.numpy as jnp
from jax import lax
from jax.experimental import pallas as pl
from jax.experimental.pallas import tpu as pltpu


def _round_up(n, m):
    return ((n + m - 1) // m) * m


# ---------------------------------------------------------------------------
# Kernel
# ---------------------------------------------------------------------------
def gru_mean_kernel(x_ref, gruw_ref, clfw_ref, const_ref, out_ref,
                    *, seq_len, bp, dp, gl):
    """x_ref:    (T*Bp, Dp)    time-major input slab (batch sublane-padded)
       gruw_ref: (GL+Dp, 3*GL) rows [0:GL]=W_hh^T, [GL:GL+Dp]=W_ih^T (per-gate
                                128-lane blocks, padded lanes exactly zero)
       clfw_ref: (2*GL, GL)    rows [0:GL]=W1, [GL:2GL]=W1b (zero padded)
       const_ref:(8, 3*GL)     packed biases / w2 row / b2 / feature means
       out_ref:  (Bp, GL)      lane-dense output tile; result in [:B, 0]."""
    T, Bp, Dp, GL = seq_len, bp, dp, gl

    # ---- unpack packed constants (one-time, off the recurrence path) --------
    C = const_ref[...]                       # (8, 3*GL)
    b_ih = C[0:1, :]                         # (1, 3*GL)
    b_hh = C[1:2, :]                         # (1, 3*GL)
    b1   = C[2:3, 0:GL]                      # (1, GL)
    b1b  = C[3:4, 0:GL]                      # (1, GL)
    w2r  = C[4:5, 0:GL]                      # (1, GL)
    b2   = C[5:6, 0:1]                       # (1, 1)
    mean = C[6:7, 0:Dp]                      # (1, Dp)

    Whh = gruw_ref[0:GL, :]                  # (GL, 3*GL)
    Wih = gruw_ref[GL:GL + Dp, :]            # (Dp, 3*GL)
    W1  = clfw_ref[0:GL, :]                  # (GL, GL)
    W1b = clfw_ref[GL:2 * GL, :]             # (GL, GL)

    # ---- hoisted one-shot work (off the serial critical path) ---------------
    x = x_ref[...]                                        # (T*Bp, Dp)
    x_imp = jnp.where(x != x, jnp.broadcast_to(mean, x.shape), x)  # NaN -> mean
    gi_all = jnp.dot(x_imp, Wih,
                     preferred_element_type=jnp.float32) + b_ih    # (T*Bp, 3*GL)

    # ---- serial GRU recurrence, statically unrolled (T small & static) ------
    # Hidden lanes H..GL stay exactly 0 because all padded weight cols / bias
    # lanes are zero (sigmoid(0)=0.5, tanh(0)=0 -> h_pad = 0 + 0.5*(0-0) = 0).
    h = jnp.zeros((Bp, GL), jnp.float32)
    for t in range(T):
        gi = gi_all[t * Bp:(t + 1) * Bp, :]               # sublane-aligned slice
        gh = jnp.dot(h, Whh, preferred_element_type=jnp.float32) + b_hh
        rz = jax.nn.sigmoid(gi[:, :2 * GL] + gh[:, :2 * GL])   # lane-tile aligned
        r = rz[:, :GL]
        z = rz[:, GL:2 * GL]
        n = jnp.tanh(gi[:, 2 * GL:] + r * gh[:, 2 * GL:])
        h = n + z * (h - n)                               # == (1-z)*n + z*h

    # ---- classifier head (all 128-lane dense) --------------------------------
    p = jax.nn.relu(jnp.dot(h, W1, preferred_element_type=jnp.float32) + b1)
    p = jax.nn.relu(jnp.dot(p, W1b, preferred_element_type=jnp.float32) + b1b)
    logit = jnp.sum(p * w2r, axis=-1, keepdims=True) + b2      # (Bp, 1) lane reduce
    pred = jax.nn.sigmoid(logit)
    out_ref[...] = jnp.broadcast_to(pred, (Bp, GL))            # unmasked full-tile vst


# ---------------------------------------------------------------------------
# One-time parameter packing (hoisted out of the per-call path)
# ---------------------------------------------------------------------------
def pack_params(params, mean_feats):
    H = params["w_hh_t"].shape[0]
    D = params["w_ih_t"].shape[0]
    GL = 128                              # per-gate lane block
    assert H <= GL
    Dp = _round_up(D, 8)
    Cw = params["w1"].shape[1]            # classifier hidden (100)
    assert Cw <= GL

    def gate_pack(w):                     # (rows, 3H) -> (rows, 3*GL)
        rows = w.shape[0]
        out = jnp.zeros((rows, 3 * GL), jnp.float32)
        for g in range(3):
            out = out.at[:, g * GL:g * GL + H].set(w[:, g * H:(g + 1) * H])
        return out

    wih = jnp.zeros((Dp, 3 * GL), jnp.float32).at[:D, :].set(
        gate_pack(params["w_ih_t"]))
    whh = jnp.zeros((GL, 3 * GL), jnp.float32).at[:H, :].set(
        gate_pack(params["w_hh_t"]))
    gru_w = jnp.concatenate([whh, wih], axis=0)            # (GL+Dp, 3*GL)

    w1 = jnp.zeros((GL, GL), jnp.float32).at[:H, :Cw].set(params["w1"])
    w1b = jnp.zeros((GL, GL), jnp.float32).at[:Cw, :Cw].set(params["w1b"])
    clf_w = jnp.concatenate([w1, w1b], axis=0)             # (2*GL, GL)

    consts = jnp.zeros((8, 3 * GL), jnp.float32)
    consts = consts.at[0, :].set(gate_pack(params["b_ih"][None, :])[0])
    consts = consts.at[1, :].set(gate_pack(params["b_hh"][None, :])[0])
    consts = consts.at[2, :Cw].set(params["b1"])
    consts = consts.at[3, :Cw].set(params["b1b"])
    consts = consts.at[4, :Cw].set(params["w2"][:, 0])
    consts = consts.at[5, 0].set(params["b2"][0])
    consts = consts.at[6, :D].set(mean_feats)

    return {"gru_w": gru_w, "clf_w": clf_w, "consts": consts}


# ---------------------------------------------------------------------------
# Jitted forward (per-call work is only the x reshape + the pallas_call)
# ---------------------------------------------------------------------------
@jax.jit
def gru_mean_forward(x_btd, packed):
    """x_btd: (B, T, D) float32, possibly containing NaNs. Returns (B,)."""
    B, T, D = x_btd.shape
    gru_w, clf_w, consts = packed["gru_w"], packed["clf_w"], packed["consts"]
    GL = clf_w.shape[1]
    Dp = gru_w.shape[0] - GL
    Bp = 8
    assert B <= Bp and D <= Dp

    # Flat time-major slab, batch padded to 8 sublanes, features padded to Dp.
    x_t = jnp.transpose(x_btd, (1, 0, 2))                               # (T, B, D)
    x_slab = jnp.zeros((T, Bp, Dp), jnp.float32).at[:, :B, :D].set(x_t)
    x_slab = x_slab.reshape(T * Bp, Dp)

    vmem = pl.BlockSpec(memory_space=pltpu.MemorySpace.VMEM)
    kernel = functools.partial(gru_mean_kernel, seq_len=T, bp=Bp, dp=Dp, gl=GL)

    out = pl.pallas_call(
        kernel,
        out_shape=jax.ShapeDtypeStruct((Bp, GL), jnp.float32),
        in_specs=[vmem] * 4,
        out_specs=vmem,
    )(x_slab, gru_w, clf_w, consts)
    return out[:B, 0]                                                   # (B,)


# ---------------------------------------------------------------------------
# Pure-JAX reference (mirrors the PyTorch module semantics)
# ---------------------------------------------------------------------------
def _reference_forward(x_btd, mean_feats, params):
    B, T, D = x_btd.shape
    H = params["w_hh_t"].shape[0]
    x = jnp.where(jnp.isnan(x_btd), mean_feats[None, None, :], x_btd)

    def step(h, xt):
        gi = xt @ params["w_ih_t"] + params["b_ih"]
        gh = h @ params["w_hh_t"] + params["b_hh"]
        r = jax.nn.sigmoid(gi[:, 0:H] + gh[:, 0:H])
        z = jax.nn.sigmoid(gi[:, H:2 * H] + gh[:, H:2 * H])
        n = jnp.tanh(gi[:, 2 * H:3 * H] + r * gh[:, 2 * H:3 * H])
        return (1.0 - z) * n + z * h, None

    hT, _ = lax.scan(step, jnp.zeros((B, H), jnp.float32),
                     jnp.transpose(x, (1, 0, 2)))
    p = jax.nn.relu(hT @ params["w1"] + params["b1"])
    p = jax.nn.relu(p @ params["w1b"] + params["b1b"])
    p = jax.nn.sigmoid(p @ params["w2"] + params["b2"])
    return p[:, 0]


def _init_params(key, input_dim, latents, clf_hidden=100):
    ks = jax.random.split(key, 12)
    s_gru = 1.0 / jnp.sqrt(latents)

    def u(k, shape, s):
        return jax.random.uniform(k, shape, jnp.float32, -s, s)

    s1 = 1.0 / jnp.sqrt(latents)
    s2 = 1.0 / jnp.sqrt(clf_hidden)
    return {
        # GRU (PyTorch gate order r, z, n), stored pre-transposed as (in, 3H)
        "w_ih_t": u(ks[0], (input_dim, 3 * latents), s_gru),
        "w_hh_t": u(ks[1], (latents, 3 * latents), s_gru),
        "b_ih":   u(ks[2], (3 * latents,), s_gru),
        "b_hh":   u(ks[3], (3 * latents,), s_gru),
        # classif_layer1: Linear(latents, 100)
        "w1":  u(ks[4], (latents, clf_hidden), s1),
        "b1":  u(ks[5], (clf_hidden,), s1),
        # classif_layer1bis: Linear(100, 100)
        "w1b": u(ks[6], (clf_hidden, clf_hidden), s2),
        "b1b": u(ks[7], (clf_hidden,), s2),
        # classif_layer2: Linear(100, 1)
        "w2":  u(ks[8], (clf_hidden, 1), s2),
        "b2":  u(ks[9], (1,), s2),
    }


if __name__ == "__main__":
    key = jax.random.PRNGKey(0)
    B, T, D, H = 2, 8, 4, 32     # batch, seq, input_dim, latents

    k_x, k_mask, k_mean, k_param = jax.random.split(key, 4)
    x = jax.random.normal(k_x, (B, T, D), jnp.float32)
    # inject NaNs to exercise the mean-imputation path
    nan_mask = jax.random.uniform(k_mask, (B, T, D)) < 0.25
    x = jnp.where(nan_mask, jnp.nan, x)
    mean_feats = jax.random.normal(k_mean, (D,), jnp.float32)

    params = _init_params(k_param, D, H)
    packed = jax.tree_util.tree_map(jax.block_until_ready,
                                    pack_params(params, mean_feats))  # once

    pred = jax.block_until_ready(gru_mean_forward(x, packed))
    ref = jax.block_until_ready(_reference_forward(x, mean_feats, params))

    assert pred.shape == (B,)
    assert bool(jnp.all(jnp.isfinite(pred)))
    assert bool(jnp.allclose(pred, ref, atol=1e-5, rtol=1e-5))
    print("KERNEL_OK")
</pallas_src>

<mosaic_0001>
module attributes {stable_mosaic.version = 11 : i64} {
  func.func @gru_mean_kernel(%arg0: memref<64x8xf32, #tpu.memory_space<vmem>>, %arg1: memref<136x384xf32, #tpu.memory_space<vmem>>, %arg2: memref<256x128xf32, #tpu.memory_space<vmem>>, %arg3: memref<8x384xf32, #tpu.memory_space<vmem>>, %arg4: memref<8x128xf32, #tpu.memory_space<vmem>>) attributes {dimension_semantics = [], scalar_prefetch = 0 : i64, scratch_operands = 0 : i64, tpu.core_type = #tpu.core_type<tc>} {
    %c0 = arith.constant 0 : index
    %c0_0 = arith.constant 0 : index
    %0 = vector.load %arg3[%c0, %c0_0] : memref<8x384xf32, #tpu.memory_space<vmem>>, vector<8x384xf32>
    %1 = vector.extract_strided_slice %0 {offsets = [0, 0], sizes = [1, 384], strides = [1, 1]} : vector<8x384xf32> to vector<1x384xf32>
    %2 = vector.extract_strided_slice %0 {offsets = [1, 0], sizes = [1, 384], strides = [1, 1]} : vector<8x384xf32> to vector<1x384xf32>
    %3 = vector.extract_strided_slice %0 {offsets = [2, 0], sizes = [1, 128], strides = [1, 1]} : vector<8x384xf32> to vector<1x128xf32>
    %4 = vector.extract_strided_slice %0 {offsets = [3, 0], sizes = [1, 128], strides = [1, 1]} : vector<8x384xf32> to vector<1x128xf32>
    %5 = vector.extract_strided_slice %0 {offsets = [4, 0], sizes = [1, 128], strides = [1, 1]} : vector<8x384xf32> to vector<1x128xf32>
    %6 = vector.extract_strided_slice %0 {offsets = [5, 0], sizes = [1, 1], strides = [1, 1]} : vector<8x384xf32> to vector<1x1xf32>
    %7 = vector.extract_strided_slice %0 {offsets = [6, 0], sizes = [1, 8], strides = [1, 1]} : vector<8x384xf32> to vector<1x8xf32>
    %c0_1 = arith.constant 0 : index
    %c0_2 = arith.constant 0 : index
    %8 = vector.load %arg1[%c0_1, %c0_2] : memref<136x384xf32, #tpu.memory_space<vmem>>, vector<128x384xf32>
    %c128 = arith.constant 128 : index
    %c0_3 = arith.constant 0 : index
    %9 = vector.load %arg1[%c128, %c0_3] : memref<136x384xf32, #tpu.memory_space<vmem>>, vector<8x384xf32>
    %c0_4 = arith.constant 0 : index
    %c0_5 = arith.constant 0 : index
    %10 = vector.load %arg2[%c0_4, %c0_5] : memref<256x128xf32, #tpu.memory_space<vmem>>, vector<128x128xf32>
    %c128_6 = arith.constant 128 : index
    %c0_7 = arith.constant 0 : index
    %11 = vector.load %arg2[%c128_6, %c0_7] : memref<256x128xf32, #tpu.memory_space<vmem>>, vector<128x128xf32>
    %c0_8 = arith.constant 0 : index
    %c0_9 = arith.constant 0 : index
    %12 = vector.load %arg0[%c0_8, %c0_9] : memref<64x8xf32, #tpu.memory_space<vmem>>, vector<64x8xf32>
    %13 = arith.cmpf one, %12, %12 : vector<64x8xf32>
    %14 = vector.shape_cast %7 : vector<1x8xf32> to vector<1x8xf32>
    %15 = vector.broadcast %14 : vector<1x8xf32> to vector<64x8xf32>
    %16 = arith.select %13, %15, %12 : vector<64x8xi1>, vector<64x8xf32>
    %cst = arith.constant dense<0.000000e+00> : vector<64x384xf32>
    %17 = tpu.matmul %16, %9, %cst {dimension_numbers = #tpu.dot_dimension_numbers<[1], [0], [0], [1], [0, 0, 1, 1], [], []>} : vector<64x8xf32>, vector<8x384xf32>, vector<64x384xf32> -> vector<64x384xf32>
    %18 = vector.broadcast %1 : vector<1x384xf32> to vector<64x384xf32>
    %19 = arith.addf %17, %18 : vector<64x384xf32>
    %cst_10 = arith.constant 0.000000e+00 : f32
    %20 = vector.broadcast %cst_10 : f32 to vector<8x128xf32>
    %21 = vector.extract_strided_slice %19 {offsets = [0, 0], sizes = [8, 384], strides = [1, 1]} : vector<64x384xf32> to vector<8x384xf32>
    %cst_11 = arith.constant dense<0.000000e+00> : vector<8x384xf32>
    %22 = tpu.matmul %20, %8, %cst_11 {dimension_numbers = #tpu.dot_dimension_numbers<[1], [0], [0], [1], [0, 0, 1, 1], [], []>} : vector<8x128xf32>, vector<128x384xf32>, vector<8x384xf32> -> vector<8x384xf32>
    %23 = vector.broadcast %2 : vector<1x384xf32> to vector<8x384xf32>
    %24 = arith.addf %22, %23 : vector<8x384xf32>
    %25 = vector.extract_strided_slice %21 {offsets = [0, 0], sizes = [8, 256], strides = [1, 1]} : vector<8x384xf32> to vector<8x256xf32>
    %26 = vector.extract_strided_slice %24 {offsets = [0, 0], sizes = [8, 256], strides = [1, 1]} : vector<8x384xf32> to vector<8x256xf32>
    %27 = arith.addf %25, %26 : vector<8x256xf32>
    %28 = arith.negf %27 : vector<8x256xf32>
    %29 = math.exp %28 : vector<8x256xf32>
    %cst_12 = arith.constant 1.000000e+00 : f32
    %30 = vector.broadcast %cst_12 : f32 to vector<8x256xf32>
    %31 = arith.addf %30, %29 : vector<8x256xf32>
    %32 = arith.divf %30, %31 : vector<8x256xf32>
    %33 = vector.extract_strided_slice %32 {offsets = [0, 0], sizes = [8, 128], strides = [1, 1]} : vector<8x256xf32> to vector<8x128xf32>
    %34 = vector.extract_strided_slice %32 {offsets = [0, 128], sizes = [8, 128], strides = [1, 1]} : vector<8x256xf32> to vector<8x128xf32>
    %35 = vector.extract_strided_slice %21 {offsets = [0, 256], sizes = [8, 128], strides = [1, 1]} : vector<8x384xf32> to vector<8x128xf32>
    %36 = vector.extract_strided_slice %24 {offsets = [0, 256], sizes = [8, 128], strides = [1, 1]} : vector<8x384xf32> to vector<8x128xf32>
    %37 = arith.mulf %33, %36 : vector<8x128xf32>
    %38 = arith.addf %35, %37 : vector<8x128xf32>
    %39 = math.tanh %38 : vector<8x128xf32>
    %40 = arith.subf %20, %39 : vector<8x128xf32>
    %41 = arith.mulf %34, %40 : vector<8x128xf32>
    %42 = arith.addf %39, %41 : vector<8x128xf32>
    %43 = vector.extract_strided_slice %19 {offsets = [8, 0], sizes = [8, 384], strides = [1, 1]} : vector<64x384xf32> to vector<8x384xf32>
    %cst_13 = arith.constant dense<0.000000e+00> : vector<8x384xf32>
    %44 = tpu.matmul %42, %8, %cst_13 {dimension_numbers = #tpu.dot_dimension_numbers<[1], [0], [0], [1], [0, 0, 1, 1], [], []>} : vector<8x128xf32>, vector<128x384xf32>, vector<8x384xf32> -> vector<8x384xf32>
    %45 = vector.broadcast %2 : vector<1x384xf32> to vector<8x384xf32>
    %46 = arith.addf %44, %45 : vector<8x384xf32>
    %47 = vector.extract_strided_slice %43 {offsets = [0, 0], sizes = [8, 256], strides = [1, 1]} : vector<8x384xf32> to vector<8x256xf32>
    %48 = vector.extract_strided_slice %46 {offsets = [0, 0], sizes = [8, 256], strides = [1, 1]} : vector<8x384xf32> to vector<8x256xf32>
    %49 = arith.addf %47, %48 : vector<8x256xf32>
    %50 = arith.negf %49 : vector<8x256xf32>
    %51 = math.exp %50 : vector<8x256xf32>
    %cst_14 = arith.constant 1.000000e+00 : f32
    %52 = vector.broadcast %cst_14 : f32 to vector<8x256xf32>
    %53 = arith.addf %52, %51 : vector<8x256xf32>
    %54 = arith.divf %52, %53 : vector<8x256xf32>
    %55 = vector.extract_strided_slice %54 {offsets = [0, 0], sizes = [8, 128], strides = [1, 1]} : vector<8x256xf32> to vector<8x128xf32>
    %56 = vector.extract_strided_slice %54 {offsets = [0, 128], sizes = [8, 128], strides = [1, 1]} : vector<8x256xf32> to vector<8x128xf32>
    %57 = vector.extract_strided_slice %43 {offsets = [0, 256], sizes = [8, 128], strides = [1, 1]} : vector<8x384xf32> to vector<8x128xf32>
    %58 = vector.extract_strided_slice %46 {offsets = [0, 256], sizes = [8, 128], strides = [1, 1]} : vector<8x384xf32> to vector<8x128xf32>
    %59 = arith.mulf %55, %58 : vector<8x128xf32>
    %60 = arith.addf %57, %59 : vector<8x128xf32>
    %61 = math.tanh %60 : vector<8x128xf32>
    %62 = arith.subf %42, %61 : vector<8x128xf32>
    %63 = arith.mulf %56, %62 : vector<8x128xf32>
    %64 = arith.addf %61, %63 : vector<8x128xf32>
    %65 = vector.extract_strided_slice %19 {offsets = [16, 0], sizes = [8, 384], strides = [1, 1]} : vector<64x384xf32> to vector<8x384xf32>
    %cst_15 = arith.constant dense<0.000000e+00> : vector<8x384xf32>
    %66 = tpu.matmul %64, %8, %cst_15 {dimension_numbers = #tpu.dot_dimension_numbers<[1], [0], [0], [1], [0, 0, 1, 1], [], []>} : vector<8x128xf32>, vector<128x384xf32>, vector<8x384xf32> -> vector<8x384xf32>
    %67 = vector.broadcast %2 : vector<1x384xf32> to vector<8x384xf32>
    %68 = arith.addf %66, %67 : vector<8x384xf32>
    %69 = vector.extract_strided_slice %65 {offsets = [0, 0], sizes = [8, 256], strides = [1, 1]} : vector<8x384xf32> to vector<8x256xf32>
    %70 = vector.extract_strided_slice %68 {offsets = [0, 0], sizes = [8, 256], strides = [1, 1]} : vector<8x384xf32> to vector<8x256xf32>
    %71 = arith.addf %69, %70 : vector<8x256xf32>
    %72 = arith.negf %71 : vector<8x256xf32>
    %73 = math.exp %72 : vector<8x256xf32>
    %cst_16 = arith.constant 1.000000e+00 : f32
    %74 = vector.broadcast %cst_16 : f32 to vector<8x256xf32>
    %75 = arith.addf %74, %73 : vector<8x256xf32>
    %76 = arith.divf %74, %75 : vector<8x256xf32>
    %77 = vector.extract_strided_slice %76 {offsets = [0, 0], sizes = [8, 128], strides = [1, 1]} : vector<8x256xf32> to vector<8x128xf32>
    %78 = vector.extract_strided_slice %76 {offsets = [0, 128], sizes = [8, 128], strides = [1, 1]} : vector<8x256xf32> to vector<8x128xf32>
    %79 = vector.extract_strided_slice %65 {offsets = [0, 256], sizes = [8, 128], strides = [1, 1]} : vector<8x384xf32> to vector<8x128xf32>
    %80 = vector.extract_strided_slice %68 {offsets = [0, 256], sizes = [8, 128], strides = [1, 1]} : vector<8x384xf32> to vector<8x128xf32>
    %81 = arith.mulf %77, %80 : vector<8x128xf32>
    %82 = arith.addf %79, %81 : vector<8x128xf32>
    %83 = math.tanh %82 : vector<8x128xf32>
    %84 = arith.subf %64, %83 : vector<8x128xf32>
    %85 = arith.mulf %78, %84 : vector<8x128xf32>
    %86 = arith.addf %83, %85 : vector<8x128xf32>
    %87 = vector.extract_strided_slice %19 {offsets = [24, 0], sizes = [8, 384], strides = [1, 1]} : vector<64x384xf32> to vector<8x384xf32>
    %cst_17 = arith.constant dense<0.000000e+00> : vector<8x384xf32>
    %88 = tpu.matmul %86, %8, %cst_17 {dimension_numbers = #tpu.dot_dimension_numbers<[1], [0], [0], [1], [0, 0, 1, 1], [], []>} : vector<8x128xf32>, vector<128x384xf32>, vector<8x384xf32> -> vector<8x384xf32>
    %89 = vector.broadcast %2 : vector<1x384xf32> to vector<8x384xf32>
    %90 = arith.addf %88, %89 : vector<8x384xf32>
    %91 = vector.extract_strided_slice %87 {offsets = [0, 0], sizes = [8, 256], strides = [1, 1]} : vector<8x384xf32> to vector<8x256xf32>
    %92 = vector.extract_strided_slice %90 {offsets = [0, 0], sizes = [8, 256], strides = [1, 1]} : vector<8x384xf32> to vector<8x256xf32>
    %93 = arith.addf %91, %92 : vector<8x256xf32>
    %94 = arith.negf %93 : vector<8x256xf32>
    %95 = math.exp %94 : vector<8x256xf32>
    %cst_18 = arith.constant 1.000000e+00 : f32
    %96 = vector.broadcast %cst_18 : f32 to vector<8x256xf32>
    %97 = arith.addf %96, %95 : vector<8x256xf32>
    %98 = arith.divf %96, %97 : vector<8x256xf32>
    %99 = vector.extract_strided_slice %98 {offsets = [0, 0], sizes = [8, 128], strides = [1, 1]} : vector<8x256xf32> to vector<8x128xf32>
    %100 = vector.extract_strided_slice %98 {offsets = [0, 128], sizes = [8, 128], strides = [1, 1]} : vector<8x256xf32> to vector<8x128xf32>
    %101 = vector.extract_strided_slice %87 {offsets = [0, 256], sizes = [8, 128], strides = [1, 1]} : vector<8x384xf32> to vector<8x128xf32>
    %102 = vector.extract_strided_slice %90 {offsets = [0, 256], sizes = [8, 128], strides = [1, 1]} : vector<8x384xf32> to vector<8x128xf32>
    %103 = arith.mulf %99, %102 : vector<8x128xf32>
    %104 = arith.addf %101, %103 : vector<8x128xf32>
    %105 = math.tanh %104 : vector<8x128xf32>
    %106 = arith.subf %86, %105 : vector<8x128xf32>
    %107 = arith.mulf %100, %106 : vector<8x128xf32>
    %108 = arith.addf %105, %107 : vector<8x128xf32>
    %109 = vector.extract_strided_slice %19 {offsets = [32, 0], sizes = [8, 384], strides = [1, 1]} : vector<64x384xf32> to vector<8x384xf32>
    %cst_19 = arith.constant dense<0.000000e+00> : vector<8x384xf32>
    %110 = tpu.matmul %108, %8, %cst_19 {dimension_numbers = #tpu.dot_dimension_numbers<[1], [0], [0], [1], [0, 0, 1, 1], [], []>} : vector<8x128xf32>, vector<128x384xf32>, vector<8x384xf32> -> vector<8x384xf32>
    %111 = vector.broadcast %2 : vector<1x384xf32> to vector<8x384xf32>
    %112 = arith.addf %110, %111 : vector<8x384xf32>
    %113 = vector.extract_strided_slice %109 {offsets = [0, 0], sizes = [8, 256], strides = [1, 1]} : vector<8x384xf32> to vector<8x256xf32>
    %114 = vector.extract_strided_slice %112 {offsets = [0, 0], sizes = [8, 256], strides = [1, 1]} : vector<8x384xf32> to vector<8x256xf32>
    %115 = arith.addf %113, %114 : vector<8x256xf32>
    %116 = arith.negf %115 : vector<8x256xf32>
    %117 = math.exp %116 : vector<8x256xf32>
    %cst_20 = arith.constant 1.000000e+00 : f32
    %118 = vector.broadcast %cst_20 : f32 to vector<8x256xf32>
    %119 = arith.addf %118, %117 : vector<8x256xf32>
    %120 = arith.divf %118, %119 : vector<8x256xf32>
    %121 = vector.extract_strided_slice %120 {offsets = [0, 0], sizes = [8, 128], strides = [1, 1]} : vector<8x256xf32> to vector<8x128xf32>
    %122 = vector.extract_strided_slice %120 {offsets = [0, 128], sizes = [8, 128], strides = [1, 1]} : vector<8x256xf32> to vector<8x128xf32>
    %123 = vector.extract_strided_slice %109 {offsets = [0, 256], sizes = [8, 128], strides = [1, 1]} : vector<8x384xf32> to vector<8x128xf32>
    %124 = vector.extract_strided_slice %112 {offsets = [0, 256], sizes = [8, 128], strides = [1, 1]} : vector<8x384xf32> to vector<8x128xf32>
    %125 = arith.mulf %121, %124 : vector<8x128xf32>
    %126 = arith.addf %123, %125 : vector<8x128xf32>
    %127 = math.tanh %126 : vector<8x128xf32>
    %128 = arith.subf %108, %127 : vector<8x128xf32>
    %129 = arith.mulf %122, %128 : vector<8x128xf32>
    %130 = arith.addf %127, %129 : vector<8x128xf32>
    %131 = vector.extract_strided_slice %19 {offsets = [40, 0], sizes = [8, 384], strides = [1, 1]} : vector<64x384xf32> to vector<8x384xf32>
    %cst_21 = arith.constant dense<0.000000e+00> : vector<8x384xf32>
    %132 = tpu.matmul %130, %8, %cst_21 {dimension_numbers = #tpu.dot_dimension_numbers<[1], [0], [0], [1], [0, 0, 1, 1], [], []>} : vector<8x128xf32>, vector<128x384xf32>, vector<8x384xf32> -> vector<8x384xf32>
    %133 = vector.broadcast %2 : vector<1x384xf32> to vector<8x384xf32>
    %134 = arith.addf %132, %133 : vector<8x384xf32>
    %135 = vector.extract_strided_slice %131 {offsets = [0, 0], sizes = [8, 256], strides = [1, 1]} : vector<8x384xf32> to vector<8x256xf32>
    %136 = vector.extract_strided_slice %134 {offsets = [0, 0], sizes = [8, 256], strides = [1, 1]} : vector<8x384xf32> to vector<8x256xf32>
    %137 = arith.addf %135, %136 : vector<8x256xf32>
    %138 = arith.negf %137 : vector<8x256xf32>
    %139 = math.exp %138 : vector<8x256xf32>
    %cst_22 = arith.constant 1.000000e+00 : f32
    %140 = vector.broadcast %cst_22 : f32 to vector<8x256xf32>
    %141 = arith.addf %140, %139 : vector<8x256xf32>
    %142 = arith.divf %140, %141 : vector<8x256xf32>
    %143 = vector.extract_strided_slice %142 {offsets = [0, 0], sizes = [8, 128], strides = [1, 1]} : vector<8x256xf32> to vector<8x128xf32>
    %144 = vector.extract_strided_slice %142 {offsets = [0, 128], sizes = [8, 128], strides = [1, 1]} : vector<8x256xf32> to vector<8x128xf32>
    %145 = vector.extract_strided_slice %131 {offsets = [0, 256], sizes = [8, 128], strides = [1, 1]} : vector<8x384xf32> to vector<8x128xf32>
    %146 = vector.extract_strided_slice %134 {offsets = [0, 256], sizes = [8, 128], strides = [1, 1]} : vector<8x384xf32> to vector<8x128xf32>
    %147 = arith.mulf %143, %146 : vector<8x128xf32>
    %148 = arith.addf %145, %147 : vector<8x128xf32>
    %149 = math.tanh %148 : vector<8x128xf32>
    %150 = arith.subf %130, %149 : vector<8x128xf32>
    %151 = arith.mulf %144, %150 : vector<8x128xf32>
    %152 = arith.addf %149, %151 : vector<8x128xf32>
    %153 = vector.extract_strided_slice %19 {offsets = [48, 0], sizes = [8, 384], strides = [1, 1]} : vector<64x384xf32> to vector<8x384xf32>
    %cst_23 = arith.constant dense<0.000000e+00> : vector<8x384xf32>
    %154 = tpu.matmul %152, %8, %cst_23 {dimension_numbers = #tpu.dot_dimension_numbers<[1], [0], [0], [1], [0, 0, 1, 1], [], []>} : vector<8x128xf32>, vector<128x384xf32>, vector<8x384xf32> -> vector<8x384xf32>
    %155 = vector.broadcast %2 : vector<1x384xf32> to vector<8x384xf32>
    %156 = arith.addf %154, %155 : vector<8x384xf32>
    %157 = vector.extract_strided_slice %153 {offsets = [0, 0], sizes = [8, 256], strides = [1, 1]} : vector<8x384xf32> to vector<8x256xf32>
    %158 = vector.extract_strided_slice %156 {offsets = [0, 0], sizes = [8, 256], strides = [1, 1]} : vector<8x384xf32> to vector<8x256xf32>
    %159 = arith.addf %157, %158 : vector<8x256xf32>
    %160 = arith.negf %159 : vector<8x256xf32>
    %161 = math.exp %160 : vector<8x256xf32>
    %cst_24 = arith.constant 1.000000e+00 : f32
    %162 = vector.broadcast %cst_24 : f32 to vector<8x256xf32>
    %163 = arith.addf %162, %161 : vector<8x256xf32>
    %164 = arith.divf %162, %163 : vector<8x256xf32>
    %165 = vector.extract_strided_slice %164 {offsets = [0, 0], sizes = [8, 128], strides = [1, 1]} : vector<8x256xf32> to vector<8x128xf32>
    %166 = vector.extract_strided_slice %164 {offsets = [0, 128], sizes = [8, 128], strides = [1, 1]} : vector<8x256xf32> to vector<8x128xf32>
    %167 = vector.extract_strided_slice %153 {offsets = [0, 256], sizes = [8, 128], strides = [1, 1]} : vector<8x384xf32> to vector<8x128xf32>
    %168 = vector.extract_strided_slice %156 {offsets = [0, 256], sizes = [8, 128], strides = [1, 1]} : vector<8x384xf32> to vector<8x128xf32>
    %169 = arith.mulf %165, %168 : vector<8x128xf32>
    %170 = arith.addf %167, %169 : vector<8x128xf32>
    %171 = math.tanh %170 : vector<8x128xf32>
    %172 = arith.subf %152, %171 : vector<8x128xf32>
    %173 = arith.mulf %166, %172 : vector<8x128xf32>
    %174 = arith.addf %171, %173 : vector<8x128xf32>
    %175 = vector.extract_strided_slice %19 {offsets = [56, 0], sizes = [8, 384], strides = [1, 1]} : vector<64x384xf32> to vector<8x384xf32>
    %cst_25 = arith.constant dense<0.000000e+00> : vector<8x384xf32>
    %176 = tpu.matmul %174, %8, %cst_25 {dimension_numbers = #tpu.dot_dimension_numbers<[1], [0], [0], [1], [0, 0, 1, 1], [], []>} : vector<8x128xf32>, vector<128x384xf32>, vector<8x384xf32> -> vector<8x384xf32>
    %177 = vector.broadcast %2 : vector<1x384xf32> to vector<8x384xf32>
    %178 = arith.addf %176, %177 : vector<8x384xf32>
    %179 = vector.extract_strided_slice %175 {offsets = [0, 0], sizes = [8, 256], strides = [1, 1]} : vector<8x384xf32> to vector<8x256xf32>
    %180 = vector.extract_strided_slice %178 {offsets = [0, 0], sizes = [8, 256], strides = [1, 1]} : vector<8x384xf32> to vector<8x256xf32>
    %181 = arith.addf %179, %180 : vector<8x256xf32>
    %182 = arith.negf %181 : vector<8x256xf32>
    %183 = math.exp %182 : vector<8x256xf32>
    %cst_26 = arith.constant 1.000000e+00 : f32
    %184 = vector.broadcast %cst_26 : f32 to vector<8x256xf32>
    %185 = arith.addf %184, %183 : vector<8x256xf32>
    %186 = arith.divf %184, %185 : vector<8x256xf32>
    %187 = vector.extract_strided_slice %186 {offsets = [0, 0], sizes = [8, 128], strides = [1, 1]} : vector<8x256xf32> to vector<8x128xf32>
    %188 = vector.extract_strided_slice %186 {offsets = [0, 128], sizes = [8, 128], strides = [1, 1]} : vector<8x256xf32> to vector<8x128xf32>
    %189 = vector.extract_strided_slice %175 {offsets = [0, 256], sizes = [8, 128], strides = [1, 1]} : vector<8x384xf32> to vector<8x128xf32>
    %190 = vector.extract_strided_slice %178 {offsets = [0, 256], sizes = [8, 128], strides = [1, 1]} : vector<8x384xf32> to vector<8x128xf32>
    %191 = arith.mulf %187, %190 : vector<8x128xf32>
    %192 = arith.addf %189, %191 : vector<8x128xf32>
    %193 = math.tanh %192 : vector<8x128xf32>
    %194 = arith.subf %174, %193 : vector<8x128xf32>
    %195 = arith.mulf %188, %194 : vector<8x128xf32>
    %196 = arith.addf %193, %195 : vector<8x128xf32>
    %cst_27 = arith.constant dense<0.000000e+00> : vector<8x128xf32>
    %197 = tpu.matmul %196, %10, %cst_27 {dimension_numbers = #tpu.dot_dimension_numbers<[1], [0], [0], [1], [0, 0, 1, 1], [], []>} : vector<8x128xf32>, vector<128x128xf32>, vector<8x128xf32> -> vector<8x128xf32>
    %198 = vector.broadcast %3 : vector<1x128xf32> to vector<8x128xf32>
    %199 = arith.addf %197, %198 : vector<8x128xf32>
    %cst_28 = arith.constant 0.000000e+00 : f32
    %200 = vector.broadcast %cst_28 : f32 to vector<8x128xf32>
    %201 = arith.maximumf %199, %200 : vector<8x128xf32>
    %cst_29 = arith.constant dense<0.000000e+00> : vector<8x128xf32>
    %202 = tpu.matmul %201, %11, %cst_29 {dimension_numbers = #tpu.dot_dimension_numbers<[1], [0], [0], [1], [0, 0, 1, 1], [], []>} : vector<8x128xf32>, vector<128x128xf32>, vector<8x128xf32> -> vector<8x128xf32>
    %203 = vector.broadcast %4 : vector<1x128xf32> to vector<8x128xf32>
    %204 = arith.addf %202, %203 : vector<8x128xf32>
    %cst_30 = arith.constant 0.000000e+00 : f32
    %205 = vector.broadcast %cst_30 : f32 to vector<8x128xf32>
    %206 = arith.maximumf %204, %205 : vector<8x128xf32>
    %207 = vector.broadcast %5 : vector<1x128xf32> to vector<8x128xf32>
    %208 = arith.mulf %206, %207 : vector<8x128xf32>
    %cst_31 = arith.constant dense<0.000000e+00> : vector<8xf32>
    %209 = vector.multi_reduction <add>, %208, %cst_31 [1] : vector<8x128xf32> to vector<8xf32>
    %210 = vector.shape_cast %209 : vector<8xf32> to vector<8x1xf32>
    %211 = vector.broadcast %6 : vector<1x1xf32> to vector<8x1xf32>
    %212 = arith.addf %210, %211 : vector<8x1xf32>
    %213 = arith.negf %212 : vector<8x1xf32>
    %214 = math.exp %213 : vector<8x1xf32>
    %cst_32 = arith.constant 1.000000e+00 : f32
    %215 = vector.broadcast %cst_32 : f32 to vector<8x1xf32>
    %216 = arith.addf %215, %214 : vector<8x1xf32>
    %217 = arith.divf %215, %216 : vector<8x1xf32>
    %218 = vector.shape_cast %217 : vector<8x1xf32> to vector<8x1xf32>
    %219 = vector.broadcast %218 : vector<8x1xf32> to vector<8x128xf32>
    %c0_33 = arith.constant 0 : index
    %c0_34 = arith.constant 0 : index
    %220 = vector.load %arg4[%c0_33, %c0_34] : memref<8x128xf32, #tpu.memory_space<vmem>>, vector<8x128xf32>
    tpu.vector_store %arg4[%c0_33, %c0_34], %219 {strides = array<i32>} : memref<8x128xf32, #tpu.memory_space<vmem>>, vector<8x128xf32>,
    return
  }
}

</mosaic_0001>

<llo_original>
// kernel: gru_mean_forward.1
$region0: #{gru_mean_forward.1}
  #allocation0 [shape = 'u32[]', space=smem, size = 0x4, offset = 0x4, fixed_abs, tag = 'smem constant byte address 0x4 - core index']
  #allocation1 [shape = 'u32[72,128]{1,0:T(1,128)}', space=vmem, size = 0x9000, scoped, tag = 'internal scratch']
  %s0 = inlined_call_operand.vmem [shape: f32[64,8], index: 0, kind: input, shape index: {}]
  %s1 = inlined_call_operand.hbm [shape: f32[136,384], index: 1, kind: input, shape index: {}]
  %s2 = inlined_call_operand.hbm [shape: f32[256,128], index: 2, kind: input, shape index: {}]
  %s3 = inlined_call_operand.vmem [shape: f32[8,384], index: 3, kind: input, shape index: {}]
  %s4 = inlined_call_operand.vmem [shape: f32[8,128], index: 4, kind: output, shape index: {}]
  %s5 = sld [smem:[#allocation0]]
  $region34: #{gru_mean_forward.1} parent=0
    _
  %s7 = ssub.s32 1, %s5
  %s8 = scalar_select 0, %s7, %s5
  $region1: #{gru_mean_forward.1} parent=0
    #allocation2 [shape = 'u8[208896]{0}', space=vmem, size = 0x33000, scoped, tag = 'input window, operand 1, single buffered']
    #allocation3 [shape = 's32[1]{0}', space=sflag, size = 0x4, scoped, tag = 'scoped memory for gru_mean_forward.1']
    #allocation4 [shape = 'u8[131072]{0}', space=vmem, size = 0x20000, scoped, tag = 'input window, operand 2, single buffered']
    #allocation5 [shape = 's32[1]{0}', space=sflag, size = 0x4, scoped, tag = 'scoped memory for gru_mean_forward.1']
    %9 = vsyncpa [#allocation3], 0
    %10 = vsyncpa [#allocation5], 0
    // Predicated region
    $region2: #{gru_mean_forward.1} parent=1 // pred_check
      _
    $region3: #{gru_mean_forward.1} parent=1 // pred_check_branch
      %12 = sbr.rel (0) target = $region5
    $region4: #{gru_mean_forward.1} parent=1 // pred_region
      _
    $region5: #{gru_mean_forward.1} parent=1 // pred_fallthru
      _
    // Predicated region
    $region6: #{gru_mean_forward.1} parent=1 // pred_check
      _
    $region7: #{gru_mean_forward.1} parent=1 // pred_check_branch
      %14 = sbr.rel (0) target = $region9
    $region8: #{gru_mean_forward.1} parent=1 // pred_region
      %16 = vsyncadd [#allocation3], 0
      %s17 = sshll.u32 %s1, 4
      %s18 = int_to_ptr.hbm [resolvable:$true] %s17
      %s19 = sshll.u32 [#allocation2], 4
      %s20 = int_to_ptr.vmem [resolvable:$true] %s19
      %25 = dma.hbm_to_vmem [thread:$0]  %s18, 6528, %s20, [#allocation3], 384, 384, 24
    $region9: #{gru_mean_forward.1} parent=1 // pred_fallthru
      _
    // Predicated region
    $region10: #{gru_mean_forward.1} parent=1 // pred_check
      _
    $region11: #{gru_mean_forward.1} parent=1 // pred_check_branch
      %27 = sbr.rel (0) target = $region13
    $region12: #{gru_mean_forward.1} parent=1 // pred_region
      %29 = vsyncadd [#allocation5], 0
      %s30 = sshll.u32 %s2, 4
      %s31 = int_to_ptr.hbm [resolvable:$true] %s30
      %s32 = sshll.u32 [#allocation4], 4
      %s33 = int_to_ptr.vmem [resolvable:$true] %s32
      %38 = dma.hbm_to_vmem [thread:$0]  %s31, 4096, %s33, [#allocation5], 128, 128, 8
    $region13: #{gru_mean_forward.1} parent=1 // pred_fallthru
      _
    // Predicated region
    $region14: #{gru_mean_forward.1} parent=1 // pred_check
      _
    $region15: #{gru_mean_forward.1} parent=1 // pred_check_branch
      %40 = sbr.rel (0) target = $region17
    $region16: #{gru_mean_forward.1} parent=1 // pred_region
      _
    $region17: #{gru_mean_forward.1} parent=1 // pred_fallthru
      _
    // Predicated region
    $region18: #{gru_mean_forward.1} parent=1 // pred_check
      _
    $region19: #{gru_mean_forward.1} parent=1 // pred_check_branch
      %42 = sbr.rel (0) target = $region21
    $region20: #{gru_mean_forward.1} parent=1 // pred_region
      %44 = dma.done [#allocation3], 6528
    $region21: #{gru_mean_forward.1} parent=1 // pred_fallthru
      _
    // Predicated region
    $region22: #{gru_mean_forward.1} parent=1 // pred_check
      _
    $region23: #{gru_mean_forward.1} parent=1 // pred_check_branch
      %46 = sbr.rel (0) target = $region25
    $region24: #{gru_mean_forward.1} parent=1 // pred_region
      %48 = dma.done [#allocation5], 4096
    $region25: #{gru_mean_forward.1} parent=1 // pred_fallthru
      _
    %v49 = vld [vmem:[%s3] sm:$0xff]
    %v50 = vld [vmem:[%s3 + $0x8] sm:$0xff]
    %v51 = vld [vmem:[%s3 + $0x10] sm:$0xff]
    %v52 = vld [vmem:[#allocation2] sm:$0xff]
    %v53 = vld [vmem:[#allocation2 + $0x8] sm:$0xff]
    %v54 = vld [vmem:[#allocation2 + $0x10] sm:$0xff]
    %v55 = vld [vmem:[#allocation2 + $0x18] sm:$0xff]
    %v56 = vld [vmem:[#allocation2 + $0x20] sm:$0xff]
    %v57 = vld [vmem:[#allocation2 + $0x28] sm:$0xff]
    %v58 = vld [vmem:[#allocation2 + $0x30] sm:$0xff]
    %v59 = vld [vmem:[#allocation2 + $0x38] sm:$0xff]
    %v60 = vld [vmem:[#allocation2 + $0x40] sm:$0xff]
    %v61 = vld [vmem:[#allocation2 + $0x48] sm:$0xff]
    %v62 = vld [vmem:[#allocation2 + $0x50] sm:$0xff]
    %v63 = vld [vmem:[#allocation2 + $0x58] sm:$0xff]
    %v64 = vld [vmem:[#allocation2 + $0x60] sm:$0xff]
    %v65 = vld [vmem:[#allocation2 + $0x68] sm:$0xff]
    %v66 = vld [vmem:[#allocation2 + $0x70] sm:$0xff]
    %v67 = vld [vmem:[#allocation2 + $0x78] sm:$0xff]
    %v68 = vld [vmem:[#allocation2 + $0x80] sm:$0xff]
    %v69 = vld [vmem:[#allocation2 + $0x88] sm:$0xff]
    %v70 = vld [vmem:[#allocation2 + $0x90] sm:$0xff]
    %v71 = vld [vmem:[#allocation2 + $0x98] sm:$0xff]
    %v72 = vld [vmem:[#allocation2 + $0xa0] sm:$0xff]
    %v73 = vld [vmem:[#allocation2 + $0xa8] sm:$0xff]
    %v74 = vld [vmem:[#allocation2 + $0xb0] sm:$0xff]
    %v75 = vld [vmem:[#allocation2 + $0xb8] sm:$0xff]
    %v76 = vld [vmem:[#allocation2 + $0xc0] sm:$0xff]
    %v77 = vld [vmem:[#allocation2 + $0xc8] sm:$0xff]
    %v78 = vld [vmem:[#allocation2 + $0xd0] sm:$0xff]
    %v79 = vld [vmem:[#allocation2 + $0xd8] sm:$0xff]
    %v80 = vld [vmem:[#allocation2 + $0xe0] sm:$0xff]
    %v81 = vld [vmem:[#allocation2 + $0xe8] sm:$0xff]
    %v82 = vld [vmem:[#allocation2 + $0xf0] sm:$0xff]
    %v83 = vld [vmem:[#allocation2 + $0xf8] sm:$0xff]
    %v84 = vld [vmem:[#allocation2 + $0x100] sm:$0xff]
    %v85 = vld [vmem:[#allocation2 + $0x108] sm:$0xff]
    %v86 = vld [vmem:[#allocation2 + $0x110] sm:$0xff]
    %v87 = vld [vmem:[#allocation2 + $0x118] sm:$0xff]
    %v88 = vld [vmem:[#allocation2 + $0x120] sm:$0xff]
    %v89 = vld [vmem:[#allocation2 + $0x128] sm:$0xff]
    %v90 = vld [vmem:[#allocation2 + $0x130] sm:$0xff]
    %v91 = vld [vmem:[#allocation2 + $0x138] sm:$0xff]
    %v92 = vld [vmem:[#allocation2 + $0x140] sm:$0xff]
    %v93 = vld [vmem:[#allocation2 + $0x148] sm:$0xff]
    %v94 = vld [vmem:[#allocation2 + $0x150] sm:$0xff]
    %v95 = vld [vmem:[#allocation2 + $0x158] sm:$0xff]
    %v96 = vld [vmem:[#allocation2 + $0x160] sm:$0xff]
    %v97 = vld [vmem:[#allocation2 + $0x168] sm:$0xff]
    %v98 = vld [vmem:[#allocation2 + $0x170] sm:$0xff]
    %v99 = vld [vmem:[#allocation2 + $0x178] sm:$0xff]
    %v100 = vld [vmem:[#allocation2 + $0x180] sm:$0xff]
    %v101 = vld [vmem:[#allocation2 + $0x188] sm:$0xff]
    %v102 = vld [vmem:[#allocation2 + $0x190] sm:$0xff]
    %v103 = vld [vmem:[#allocation4] sm:$0xff]
    %v104 = vld [vmem:[#allocation4 + $0x8] sm:$0xff]
    %v105 = vld [vmem:[#allocation4 + $0x10] sm:$0xff]
    %v106 = vld [vmem:[#allocation4 + $0x18] sm:$0xff]
    %v107 = vld [vmem:[#allocation4 + $0x20] sm:$0xff]
    %v108 = vld [vmem:[#allocation4 + $0x28] sm:$0xff]
    %v109 = vld [vmem:[#allocation4 + $0x30] sm:$0xff]
    %v110 = vld [vmem:[#allocation4 + $0x38] sm:$0xff]
    %v111 = vld [vmem:[#allocation4 + $0x40] sm:$0xff]
    %v112 = vld [vmem:[#allocation4 + $0x48] sm:$0xff]
    %v113 = vld [vmem:[#allocation4 + $0x50] sm:$0xff]
    %v114 = vld [vmem:[#allocation4 + $0x58] sm:$0xff]
    %v115 = vld [vmem:[#allocation4 + $0x60] sm:$0xff]
    %v116 = vld [vmem:[#allocation4 + $0x68] sm:$0xff]
    %v117 = vld [vmem:[#allocation4 + $0x70] sm:$0xff]
    %v118 = vld [vmem:[#allocation4 + $0x78] sm:$0xff]
    %v119 = vld [vmem:[#allocation4 + $0x80] sm:$0xff]
    %v120 = vld [vmem:[#allocation4 + $0x88] sm:$0xff]
    %v121 = vld [vmem:[#allocation4 + $0x90] sm:$0xff]
    %v122 = vld [vmem:[#allocation4 + $0x98] sm:$0xff]
    %v123 = vld [vmem:[#allocation4 + $0xa0] sm:$0xff]
    %v124 = vld [vmem:[#allocation4 + $0xa8] sm:$0xff]
    %v125 = vld [vmem:[#allocation4 + $0xb0] sm:$0xff]
    %v126 = vld [vmem:[#allocation4 + $0xb8] sm:$0xff]
    %v127 = vld [vmem:[#allocation4 + $0xc0] sm:$0xff]
    %v128 = vld [vmem:[#allocation4 + $0xc8] sm:$0xff]
    %v129 = vld [vmem:[#allocation4 + $0xd0] sm:$0xff]
    %v130 = vld [vmem:[#allocation4 + $0xd8] sm:$0xff]
    %v131 = vld [vmem:[#allocation4 + $0xe0] sm:$0xff]
    %v132 = vld [vmem:[#allocation4 + $0xe8] sm:$0xff]
    %v133 = vld [vmem:[#allocation4 + $0xf0] sm:$0xff]
    %v134 = vld [vmem:[#allocation4 + $0xf8] sm:$0xff]
    %v135 = vld [vmem:[%s0] sm:$0xff]
    %v136 = vld [vmem:[%s0 + $0x8] sm:$0xff]
    %v137 = vld [vmem:[%s0 + $0x10] sm:$0xff]
    %v138 = vld [vmem:[%s0 + $0x18] sm:$0xff]
    %v139 = vld [vmem:[%s0 + $0x20] sm:$0xff]
    %v140 = vld [vmem:[%s0 + $0x28] sm:$0xff]
    %v141 = vld [vmem:[%s0 + $0x30] sm:$0xff]
    %v142 = vld [vmem:[%s0 + $0x38] sm:$0xff]
    %vm143 = vcmp.ne.f32.partialorder %v135, %v135
    %vm144 = vcmp.ne.f32.partialorder %v136, %v136
    %vm145 = vcmp.ne.f32.partialorder %v137, %v137
    %vm146 = vcmp.ne.f32.partialorder %v138, %v138
    %vm147 = vcmp.ne.f32.partialorder %v139, %v139
    %vm148 = vcmp.ne.f32.partialorder %v140, %v140
    %vm149 = vcmp.ne.f32.partialorder %v141, %v141
    %vm150 = vcmp.ne.f32.partialorder %v142, %v142
    %v151 = vperm.slane %v49, 6
    %v152 = vsel %vm143, %v151, %v135
    %v153 = vsel %vm144, %v151, %v136
    %v154 = vsel %vm145, %v151, %v137
    %v155 = vsel %vm146, %v151, %v138
    %v156 = vsel %vm147, %v151, %v139
    %v157 = vsel %vm148, %v151, %v140
    %v158 = vsel %vm149, %v151, %v141
    %v159 = vsel %vm150, %v151, %v142
    %v160 = vperm.slane %v49, 0
    %v161 = vperm.slane %v50, 0
    %v162 = vperm.slane %v51, 0
    %vm163 = vcmask 64512
    %v165 = vsel %vm163, %v152, 0
    %v168 = vsel %vm163, %v153, 0
    %v171 = vsel %vm163, %v154, 0
    %v174 = vsel %vm163, %v155, 0
    %v177 = vsel %vm163, %v156, 0
    %v180 = vsel %vm163, %v157, 0
    %v183 = vsel %vm163, %v158, 0
    %v186 = vsel %vm163, %v159, 0
    %188 = vmatpush.msra.mxu0 0.0
    %189 = vmatpush.msra.mxu0 0.0
    %190 = vmatpush.msra.mxu0 0.0
    %191 = vmatpush.msra.mxu0 0.0
    %192 = vmatpush.msra.mxu0 0.0
    %193 = vmatpush.msra.mxu0 0.0
    %194 = vmatpush.msra.mxu0 0.0
    %195 = vmatpush.msra.mxu0 0.0
    %196 = vmatpush.msra.mxu0 0.0
    %197 = vmatpush.msra.mxu0 0.0
    %198 = vmatpush.msra.mxu0 0.0
    %199 = vmatpush.msra.mxu0 0.0
    %200 = vmatpush.msra.mxu0 0.0
    %201 = vmatpush.msra.mxu0 0.0
    %202 = vmatpush.msra.mxu0 0.0
    %203 = vmatpush.msra.mxu0 %v100
    %204 = vmatmul.f32.gmra.mxu0 %v165
    %v205 = vpop.f32.mrf.mxu0
    %v206 = vadd.f32 %v160, %v205
    %207 = vmatmul.f32.gmra.mxu0 %v168
    %v208 = vpop.f32.mrf.mxu0
    %v209 = vadd.f32 %v160, %v208
    %210 = vmatmul.f32.gmra.mxu0 %v171
    %v211 = vpop.f32.mrf.mxu0
    %v212 = vadd.f32 %v160, %v211
    %213 = vmatmul.f32.gmra.mxu0 %v174
    %v214 = vpop.f32.mrf.mxu0
    %v215 = vadd.f32 %v160, %v214
    %216 = vmatmul.f32.gmra.mxu0 %v177
    %v217 = vpop.f32.mrf.mxu0
    %v218 = vadd.f32 %v160, %v217
    %219 = vmatmul.f32.gmra.mxu0 %v180
    %v220 = vpop.f32.mrf.mxu0
    %v221 = vadd.f32 %v160, %v220
    %222 = vmatmul.f32.gmra.mxu0 %v183
    %v223 = vpop.f32.mrf.mxu0
    %v224 = vadd.f32 %v160, %v223
    %225 = vmatmul.f32.gmra.mxu0 %v186
    %v226 = vpop.f32.mrf.mxu0
    %v227 = vadd.f32 %v160, %v226
    %228 = vdwg.mxu0
    %229 = vmatpush.msra.mxu0 0.0
    %230 = vmatpush.msra.mxu0 0.0
    %231 = vmatpush.msra.mxu0 0.0
    %232 = vmatpush.msra.mxu0 0.0
    %233 = vmatpush.msra.mxu0 0.0
    %234 = vmatpush.msra.mxu0 0.0
    %235 = vmatpush.msra.mxu0 0.0
    %236 = vmatpush.msra.mxu0 0.0
    %237 = vmatpush.msra.mxu0 0.0
    %238 = vmatpush.msra.mxu0 0.0
    %239 = vmatpush.msra.mxu0 0.0
    %240 = vmatpush.msra.mxu0 0.0
    %241 = vmatpush.msra.mxu0 0.0
    %242 = vmatpush.msra.mxu0 0.0
    %243 = vmatpush.msra.mxu0 0.0
    %244 = vmatpush.msra.mxu0 %v101
    %245 = vmatmul.f32.gmra.mxu0 %v165
    %v246 = vpop.f32.mrf.mxu0
    %v247 = vadd.f32 %v161, %v246
    %248 = vmatmul.f32.gmra.mxu0 %v168
    %v249 = vpop.f32.mrf.mxu0
    %v250 = vadd.f32 %v161, %v249
    %251 = vmatmul.f32.gmra.mxu0 %v171
    %v252 = vpop.f32.mrf.mxu0
    %v253 = vadd.f32 %v161, %v252
    %254 = vmatmul.f32.gmra.mxu0 %v174
    %v255 = vpop.f32.mrf.mxu0
    %v256 = vadd.f32 %v161, %v255
    %257 = vmatmul.f32.gmra.mxu0 %v177
    %v258 = vpop.f32.mrf.mxu0
    %v259 = vadd.f32 %v161, %v258
    %260 = vmatmul.f32.gmra.mxu0 %v180
    %v261 = vpop.f32.mrf.mxu0
    %v262 = vadd.f32 %v161, %v261
    %263 = vmatmul.f32.gmra.mxu0 %v183
    %v264 = vpop.f32.mrf.mxu0
    %v265 = vadd.f32 %v161, %v264
    %266 = vmatmul.f32.gmra.mxu0 %v186
    %v267 = vpop.f32.mrf.mxu0
    %v268 = vadd.f32 %v161, %v267
    %269 = vdwg.mxu0
    %270 = vmatpush.msra.mxu0 0.0
    %271 = vmatpush.msra.mxu0 0.0
    %272 = vmatpush.msra.mxu0 0.0
    %273 = vmatpush.msra.mxu0 0.0
    %274 = vmatpush.msra.mxu0 0.0
    %275 = vmatpush.msra.mxu0 0.0
    %276 = vmatpush.msra.mxu0 0.0
    %277 = vmatpush.msra.mxu0 0.0
    %278 = vmatpush.msra.mxu0 0.0
    %279 = vmatpush.msra.mxu0 0.0
    %280 = vmatpush.msra.mxu0 0.0
    %281 = vmatpush.msra.mxu0 0.0
    %282 = vmatpush.msra.mxu0 0.0
    %283 = vmatpush.msra.mxu0 0.0
    %284 = vmatpush.msra.mxu0 0.0
    %285 = vmatpush.msra.mxu0 %v102
    %286 = vmatmul.f32.gmra.mxu0 %v165
    %v287 = vpop.f32.mrf.mxu0
    %v288 = vadd.f32 %v162, %v287
    %289 = vmatmul.f32.gmra.mxu0 %v168
    %v290 = vpop.f32.mrf.mxu0
    %v291 = vadd.f32 %v162, %v290
    %292 = vmatmul.f32.gmra.mxu0 %v171
    %v293 = vpop.f32.mrf.mxu0
    %v294 = vadd.f32 %v162, %v293
    %295 = vmatmul.f32.gmra.mxu0 %v174
    %v296 = vpop.f32.mrf.mxu0
    %v297 = vadd.f32 %v162, %v296
    %298 = vmatmul.f32.gmra.mxu0 %v177
    %v299 = vpop.f32.mrf.mxu0
    %v300 = vadd.f32 %v162, %v299
    %301 = vmatmul.f32.gmra.mxu0 %v180
    %v302 = vpop.f32.mrf.mxu0
    %v303 = vadd.f32 %v162, %v302
    %304 = vmatmul.f32.gmra.mxu0 %v183
    %v305 = vpop.f32.mrf.mxu0
    %v306 = vadd.f32 %v162, %v305
    %307 = vmatmul.f32.gmra.mxu0 %v186
    %v308 = vpop.f32.mrf.mxu0
    %v309 = vadd.f32 %v162, %v308
    %310 = vdwg.mxu0
    %v311 = vperm.slane %v49, 1
    %v312 = vperm.slane %v50, 1
    %v313 = vperm.slane %v51, 1
    %314 = vmatpush.msra.mxu0 %v97
    %315 = vmatpush.msra.mxu0 %v94
    %316 = vmatpush.msra.mxu0 %v91
    %317 = vmatpush.msra.mxu0 %v88
    %318 = vmatpush.msra.mxu0 %v85
    %319 = vmatpush.msra.mxu0 %v82
    %320 = vmatpush.msra.mxu0 %v79
    %321 = vmatpush.msra.mxu0 %v76
    %322 = vmatpush.msra.mxu0 %v73
    %323 = vmatpush.msra.mxu0 %v70
    %324 = vmatpush.msra.mxu0 %v67
    %325 = vmatpush.msra.mxu0 %v64
    %326 = vmatpush.msra.mxu0 %v61
    %327 = vmatpush.msra.mxu0 %v58
    %328 = vmatpush.msra.mxu0 %v55
    %329 = vmatpush.msra.mxu0 %v52
    %330 = vmatmul.f32.gmra.mxu0 0.0
    %v331 = vpop.f32.mrf.mxu0
    %v332 = vadd.f32 %v311, %v331
    %333 = vdwg.mxu0
    %334 = vmatpush.msra.mxu0 %v98
    %335 = vmatpush.msra.mxu0 %v95
    %336 = vmatpush.msra.mxu0 %v92
    %337 = vmatpush.msra.mxu0 %v89
    %338 = vmatpush.msra.mxu0 %v86
    %339 = vmatpush.msra.mxu0 %v83
    %340 = vmatpush.msra.mxu0 %v80
    %341 = vmatpush.msra.mxu0 %v77
    %342 = vmatpush.msra.mxu0 %v74
    %343 = vmatpush.msra.mxu0 %v71
    %344 = vmatpush.msra.mxu0 %v68
    %345 = vmatpush.msra.mxu0 %v65
    %346 = vmatpush.msra.mxu0 %v62
    %347 = vmatpush.msra.mxu0 %v59
    %348 = vmatpush.msra.mxu0 %v56
    %349 = vmatpush.msra.mxu0 %v53
    %350 = vmatmul.f32.gmra.mxu0 0.0
    %v351 = vpop.f32.mrf.mxu0
    %v352 = vadd.f32 %v312, %v351
    %353 = vdwg.mxu0
    %354 = vmatpush.msra.mxu0 %v99
    %355 = vmatpush.msra.mxu0 %v96
    %356 = vmatpush.msra.mxu0 %v93
    %357 = vmatpush.msra.mxu0 %v90
    %358 = vmatpush.msra.mxu0 %v87
    %359 = vmatpush.msra.mxu0 %v84
    %360 = vmatpush.msra.mxu0 %v81
    %361 = vmatpush.msra.mxu0 %v78
    %362 = vmatpush.msra.mxu0 %v75
    %363 = vmatpush.msra.mxu0 %v72
    %364 = vmatpush.msra.mxu0 %v69
    %365 = vmatpush.msra.mxu0 %v66
    %366 = vmatpush.msra.mxu0 %v63
    %367 = vmatpush.msra.mxu0 %v60
    %368 = vmatpush.msra.mxu0 %v57
    %369 = vmatpush.msra.mxu0 %v54
    %370 = vmatmul.f32.gmra.mxu0 0.0
    %v371 = vpop.f32.mrf.mxu0
    %v372 = vadd.f32 %v313, %v371
    %373 = vdwg.mxu0
    %v374 = vadd.f32 %v206, %v332
    %v375 = vadd.f32 %v247, %v352
    %v376 = vxor.u32 %v374, 2147483648
    %v377 = vxor.u32 %v375, 2147483648
    %v378 = vmul.f32 %v376, 1.442695
    %v379 = vpow.pop %v378
    %v380 = vmul.f32 %v377, 1.442695
    %v381 = vpow.pop %v380
    %v382 = vadd.f32 %v379, 1.0
    %v383 = vadd.f32 %v381, 1.0
    %v384 = vrcp.pop %v382
    %v385 = vmul.f32 %v382, %v384
    %v386 = vsub.f32 1.0, %v385
    %v387 = vmul.f32 %v384, %v386
    %v388 = vadd.f32 %v384, %v387
    %vm389 = vweird.f32 %v382
    %vm390 = vweird.f32 %v384
    %vm391 = vmor %vm389, %vm390
    %v392 = vsel %vm391, %v384, %v388
    %v393 = vand.u32 2147483647, %v382
    %vm394 = vcmp.eq.f32.partialorder %v393, 8.507059e+37
    %v395 = vand.u32 %v382, 2147483648
    %v396 = vor.u32 1.1754944e-38, %v395
    %v397 = vsel %vm394, %v396, %v392
    %v398 = vmul.f32 1.0, %v397
    %v399 = vrcp.pop %v383
    %v400 = vmul.f32 %v383, %v399
    %v401 = vsub.f32 1.0, %v400
    %v402 = vmul.f32 %v399, %v401
    %v403 = vadd.f32 %v399, %v402
    %vm404 = vweird.f32 %v383
    %vm405 = vweird.f32 %v399
    %vm406 = vmor %vm404, %vm405
    %v407 = vsel %vm406, %v399, %v403
    %v408 = vand.u32 2147483647, %v383
    %vm409 = vcmp.eq.f32.partialorder %v408, 8.507059e+37
    %v410 = vand.u32 %v383, 2147483648
    %v411 = vor.u32 1.1754944e-38, %v410
    %v412 = vsel %vm409, %v411, %v407
    %v413 = vmul.f32 1.0, %v412
    %v414 = vmul.f32 %v398, %v372
    %v415 = vadd.f32 %v288, %v414
    %v416 = vtanh.pop %v415
    %v417 = vsub.f32 0.0, %v416
    %v418 = vmul.f32 %v413, %v417
    %v419 = vadd.f32 %v416, %v418
    %420 = vmatpush.msra.mxu0 %v97
    %421 = vmatpush.msra.mxu0 %v94
    %422 = vmatpush.msra.mxu0 %v91
    %423 = vmatpush.msra.mxu0 %v88
    %424 = vmatpush.msra.mxu0 %v85
    %425 = vmatpush.msra.mxu0 %v82
    %426 = vmatpush.msra.mxu0 %v79
    %427 = vmatpush.msra.mxu0 %v76
    %428 = vmatpush.msra.mxu0 %v73
    %429 = vmatpush.msra.mxu0 %v70
    %430 = vmatpush.msra.mxu0 %v67
    %431 = vmatpush.msra.mxu0 %v64
    %432 = vmatpush.msra.mxu0 %v61
    %433 = vmatpush.msra.mxu0 %v58
    %434 = vmatpush.msra.mxu0 %v55
    %435 = vmatpush.msra.mxu0 %v52
    %436 = vmatmul.f32.gmra.mxu0 %v419
    %v437 = vpop.f32.mrf.mxu0
    %v438 = vadd.f32 %v311, %v437
    %439 = vdwg.mxu0
    %440 = vmatpush.msra.mxu0 %v98
    %441 = vmatpush.msra.mxu0 %v95
    %442 = vmatpush.msra.mxu0 %v92
    %443 = vmatpush.msra.mxu0 %v89
    %444 = vmatpush.msra.mxu0 %v86
    %445 = vmatpush.msra.mxu0 %v83
    %446 = vmatpush.msra.mxu0 %v80
    %447 = vmatpush.msra.mxu0 %v77
    %448 = vmatpush.msra.mxu0 %v74
    %449 = vmatpush.msra.mxu0 %v71
    %450 = vmatpush.msra.mxu0 %v68
    %451 = vmatpush.msra.mxu0 %v65
    %452 = vmatpush.msra.mxu0 %v62
    %453 = vmatpush.msra.mxu0 %v59
    %454 = vmatpush.msra.mxu0 %v56
    %455 = vmatpush.msra.mxu0 %v53
    %456 = vmatmul.f32.gmra.mxu0 %v419
    %v457 = vpop.f32.mrf.mxu0
    %v458 = vadd.f32 %v312, %v457
    %459 = vdwg.mxu0
    %460 = vmatpush.msra.mxu0 %v99
    %461 = vmatpush.msra.mxu0 %v96
    %462 = vmatpush.msra.mxu0 %v93
    %463 = vmatpush.msra.mxu0 %v90
    %464 = vmatpush.msra.mxu0 %v87
    %465 = vmatpush.msra.mxu0 %v84
    %466 = vmatpush.msra.mxu0 %v81
    %467 = vmatpush.msra.mxu0 %v78
    %468 = vmatpush.msra.mxu0 %v75
    %469 = vmatpush.msra.mxu0 %v72
    %470 = vmatpush.msra.mxu0 %v69
    %471 = vmatpush.msra.mxu0 %v66
    %472 = vmatpush.msra.mxu0 %v63
    %473 = vmatpush.msra.mxu0 %v60
    %474 = vmatpush.msra.mxu0 %v57
    %475 = vmatpush.msra.mxu0 %v54
    %476 = vmatmul.f32.gmra.mxu0 %v419
    %v477 = vpop.f32.mrf.mxu0
    %v478 = vadd.f32 %v313, %v477
    %479 = vdwg.mxu0
    %v480 = vadd.f32 %v209, %v438
    %v481 = vadd.f32 %v250, %v458
    %v482 = vxor.u32 %v480, 2147483648
    %v483 = vxor.u32 %v481, 2147483648
    %v484 = vmul.f32 %v482, 1.442695
    %v485 = vpow.pop %v484
    %v486 = vmul.f32 %v483, 1.442695
    %v487 = vpow.pop %v486
    %v488 = vadd.f32 %v485, 1.0
    %v489 = vadd.f32 %v487, 1.0
    %v490 = vrcp.pop %v488
    %v491 = vmul.f32 %v488, %v490
    %v492 = vsub.f32 1.0, %v491
    %v493 = vmul.f32 %v490, %v492
    %v494 = vadd.f32 %v490, %v493
    %vm495 = vweird.f32 %v488
    %vm496 = vweird.f32 %v490
    %vm497 = vmor %vm495, %vm496
    %v498 = vsel %vm497, %v490, %v494
    %v499 = vand.u32 2147483647, %v488
    %vm500 = vcmp.eq.f32.partialorder %v499, 8.507059e+37
    %v501 = vand.u32 %v488, 2147483648
    %v502 = vor.u32 1.1754944e-38, %v501
    %v503 = vsel %vm500, %v502, %v498
    %v504 = vmul.f32 1.0, %v503
    %v505 = vrcp.pop %v489
    %v506 = vmul.f32 %v489, %v505
    %v507 = vsub.f32 1.0, %v506
    %v508 = vmul.f32 %v505, %v507
    %v509 = vadd.f32 %v505, %v508
    %vm510 = vweird.f32 %v489
    %vm511 = vweird.f32 %v505
    %vm512 = vmor %vm510, %vm511
    %v513 = vsel %vm512, %v505, %v509
    %v514 = vand.u32 2147483647, %v489
    %vm515 = vcmp.eq.f32.partialorder %v514, 8.507059e+37
    %v516 = vand.u32 %v489, 2147483648
    %v517 = vor.u32 1.1754944e-38, %v516
    %v518 = vsel %vm515, %v517, %v513
    %v519 = vmul.f32 1.0, %v518
    %v520 = vmul.f32 %v504, %v478
    %v521 = vadd.f32 %v291, %v520
    %v522 = vtanh.pop %v521
    %v523 = vsub.f32 %v419, %v522
    %v524 = vmul.f32 %v519, %v523
    %v525 = vadd.f32 %v522, %v524
    %526 = vmatpush.msra.mxu0 %v97
    %527 = vmatpush.msra.mxu0 %v94
    %528 = vmatpush.msra.mxu0 %v91
    %529 = vmatpush.msra.mxu0 %v88
    %530 = vmatpush.msra.mxu0 %v85
    %531 = vmatpush.msra.mxu0 %v82
    %532 = vmatpush.msra.mxu0 %v79
    %533 = vmatpush.msra.mxu0 %v76
    %534 = vmatpush.msra.mxu0 %v73
    %535 = vmatpush.msra.mxu0 %v70
    %536 = vmatpush.msra.mxu0 %v67
    %537 = vmatpush.msra.mxu0 %v64
    %538 = vmatpush.msra.mxu0 %v61
    %539 = vmatpush.msra.mxu0 %v58
    %540 = vmatpush.msra.mxu0 %v55
    %541 = vmatpush.msra.mxu0 %v52
    %542 = vmatmul.f32.gmra.mxu0 %v525
    %v543 = vpop.f32.mrf.mxu0
    %v544 = vadd.f32 %v311, %v543
    %545 = vdwg.mxu0
    %546 = vmatpush.msra.mxu0 %v98
    %547 = vmatpush.msra.mxu0 %v95
    %548 = vmatpush.msra.mxu0 %v92
    %549 = vmatpush.msra.mxu0 %v89
    %550 = vmatpush.msra.mxu0 %v86
    %551 = vmatpush.msra.mxu0 %v83
    %552 = vmatpush.msra.mxu0 %v80
    %553 = vmatpush.msra.mxu0 %v77
    %554 = vmatpush.msra.mxu0 %v74
    %555 = vmatpush.msra.mxu0 %v71
    %556 = vmatpush.msra.mxu0 %v68
    %557 = vmatpush.msra.mxu0 %v65
    %558 = vmatpush.msra.mxu0 %v62
    %559 = vmatpush.msra.mxu0 %v59
    %560 = vmatpush.msra.mxu0 %v56
    %561 = vmatpush.msra.mxu0 %v53
    %562 = vmatmul.f32.gmra.mxu0 %v525
    %v563 = vpop.f32.mrf.mxu0
    %v564 = vadd.f32 %v312, %v563
    %565 = vdwg.mxu0
    %566 = vmatpush.msra.mxu0 %v99
    %567 = vmatpush.msra.mxu0 %v96
    %568 = vmatpush.msra.mxu0 %v93
    %569 = vmatpush.msra.mxu0 %v90
    %570 = vmatpush.msra.mxu0 %v87
    %571 = vmatpush.msra.mxu0 %v84
    %572 = vmatpush.msra.mxu0 %v81
    %573 = vmatpush.msra.mxu0 %v78
    %574 = vmatpush.msra.mxu0 %v75
    %575 = vmatpush.msra.mxu0 %v72
    %576 = vmatpush.msra.mxu0 %v69
    %577 = vmatpush.msra.mxu0 %v66
    %578 = vmatpush.msra.mxu0 %v63
    %579 = vmatpush.msra.mxu0 %v60
    %580 = vmatpush.msra.mxu0 %v57
    %581 = vmatpush.msra.mxu0 %v54
    %582 = vmatmul.f32.gmra.mxu0 %v525
    %v583 = vpop.f32.mrf.mxu0
    %v584 = vadd.f32 %v313, %v583
    %585 = vdwg.mxu0
    %v586 = vadd.f32 %v212, %v544
    %v587 = vadd.f32 %v253, %v564
    %v588 = vxor.u32 %v586, 2147483648
    %v589 = vxor.u32 %v587, 2147483648
    %v590 = vmul.f32 %v588, 1.442695
    %v591 = vpow.pop %v590
    %v592 = vmul.f32 %v589, 1.442695
    %v593 = vpow.pop %v592
    %v594 = vadd.f32 %v591, 1.0
    %v595 = vadd.f32 %v593, 1.0
    %v596 = vrcp.pop %v594
    %v597 = vmul.f32 %v594, %v596
    %v598 = vsub.f32 1.0, %v597
    %v599 = vmul.f32 %v596, %v598
    %v600 = vadd.f32 %v596, %v599
    %vm601 = vweird.f32 %v594
    %vm602 = vweird.f32 %v596
    %vm603 = vmor %vm601, %vm602
    %v604 = vsel %vm603, %v596, %v600
    %v605 = vand.u32 2147483647, %v594
    %vm606 = vcmp.eq.f32.partialorder %v605, 8.507059e+37
    %v607 = vand.u32 %v594, 2147483648
    %v608 = vor.u32 1.1754944e-38, %v607
    %v609 = vsel %vm606, %v608, %v604
    %v610 = vmul.f32 1.0, %v609
    %v611 = vrcp.pop %v595
    %v612 = vmul.f32 %v595, %v611
    %v613 = vsub.f32 1.0, %v612
    %v614 = vmul.f32 %v611, %v613
    %v615 = vadd.f32 %v611, %v614
    %vm616 = vweird.f32 %v595
    %vm617 = vweird.f32 %v611
    %vm618 = vmor %vm616, %vm617
    %v619 = vsel %vm618, %v611, %v615
    %v620 = vand.u32 2147483647, %v595
    %vm621 = vcmp.eq.f32.partialorder %v620, 8.507059e+37
    %v622 = vand.u32 %v595, 2147483648
    %v623 = vor.u32 1.1754944e-38, %v622
    %v624 = vsel %vm621, %v623, %v619
    %v625 = vmul.f32 1.0, %v624
    %v626 = vmul.f32 %v610, %v584
    %v627 = vadd.f32 %v294, %v626
    %v628 = vtanh.pop %v627
    %v629 = vsub.f32 %v525, %v628
    %v630 = vmul.f32 %v625, %v629
    %v631 = vadd.f32 %v628, %v630
    %632 = vmatpush.msra.mxu0 %v97
    %633 = vmatpush.msra.mxu0 %v94
    %634 = vmatpush.msra.mxu0 %v91
    %635 = vmatpush.msra.mxu0 %v88
    %636 = vmatpush.msra.mxu0 %v85
    %637 = vmatpush.msra.mxu0 %v82
    %638 = vmatpush.msra.mxu0 %v79
    %639 = vmatpush.msra.mxu0 %v76
    %640 = vmatpush.msra.mxu0 %v73
    %641 = vmatpush.msra.mxu0 %v70
    %642 = vmatpush.msra.mxu0 %v67
    %643 = vmatpush.msra.mxu0 %v64
    %644 = vmatpush.msra.mxu0 %v61
    %645 = vmatpush.msra.mxu0 %v58
    %646 = vmatpush.msra.mxu0 %v55
    %647 = vmatpush.msra.mxu0 %v52
    %648 = vmatmul.f32.gmra.mxu0 %v631
    %v649 = vpop.f32.mrf.mxu0
    %v650 = vadd.f32 %v311, %v649
    %651 = vdwg.mxu0
    %652 = vmatpush.msra.mxu0 %v98
    %653 = vmatpush.msra.mxu0 %v95
    %654 = vmatpush.msra.mxu0 %v92
    %655 = vmatpush.msra.mxu0 %v89
    %656 = vmatpush.msra.mxu0 %v86
    %657 = vmatpush.msra.mxu0 %v83
    %658 = vmatpush.msra.mxu0 %v80
    %659 = vmatpush.msra.mxu0 %v77
    %660 = vmatpush.msra.mxu0 %v74
    %661 = vmatpush.msra.mxu0 %v71
    %662 = vmatpush.msra.mxu0 %v68
    %663 = vmatpush.msra.mxu0 %v65
    %664 = vmatpush.msra.mxu0 %v62
    %665 = vmatpush.msra.mxu0 %v59
    %666 = vmatpush.msra.mxu0 %v56
    %667 = vmatpush.msra.mxu0 %v53
    %668 = vmatmul.f32.gmra.mxu0 %v631
    %v669 = vpop.f32.mrf.mxu0
    %v670 = vadd.f32 %v312, %v669
    %671 = vdwg.mxu0
    %672 = vmatpush.msra.mxu0 %v99
    %673 = vmatpush.msra.mxu0 %v96
    %674 = vmatpush.msra.mxu0 %v93
    %675 = vmatpush.msra.mxu0 %v90
    %676 = vmatpush.msra.mxu0 %v87
    %677 = vmatpush.msra.mxu0 %v84
    %678 = vmatpush.msra.mxu0 %v81
    %679 = vmatpush.msra.mxu0 %v78
    %680 = vmatpush.msra.mxu0 %v75
    %681 = vmatpush.msra.mxu0 %v72
    %682 = vmatpush.msra.mxu0 %v69
    %683 = vmatpush.msra.mxu0 %v66
    %684 = vmatpush.msra.mxu0 %v63
    %685 = vmatpush.msra.mxu0 %v60
    %686 = vmatpush.msra.mxu0 %v57
    %687 = vmatpush.msra.mxu0 %v54
    %688 = vmatmul.f32.gmra.mxu0 %v631
    %v689 = vpop.f32.mrf.mxu0
    %v690 = vadd.f32 %v313, %v689
    %691 = vdwg.mxu0
    %v692 = vadd.f32 %v215, %v650
    %v693 = vadd.f32 %v256, %v670
    %v694 = vxor.u32 %v692, 2147483648
    %v695 = vxor.u32 %v693, 2147483648
    %v696 = vmul.f32 %v694, 1.442695
    %v697 = vpow.pop %v696
    %v698 = vmul.f32 %v695, 1.442695
    %v699 = vpow.pop %v698
    %v700 = vadd.f32 %v697, 1.0
    %v701 = vadd.f32 %v699, 1.0
    %v702 = vrcp.pop %v700
    %v703 = vmul.f32 %v700, %v702
    %v704 = vsub.f32 1.0, %v703
    %v705 = vmul.f32 %v702, %v704
    %v706 = vadd.f32 %v702, %v705
    %vm707 = vweird.f32 %v700
    %vm708 = vweird.f32 %v702
    %vm709 = vmor %vm707, %vm708
    %v710 = vsel %vm709, %v702, %v706
    %v711 = vand.u32 2147483647, %v700
    %vm712 = vcmp.eq.f32.partialorder %v711, 8.507059e+37
    %v713 = vand.u32 %v700, 2147483648
    %v714 = vor.u32 1.1754944e-38, %v713
    %v715 = vsel %vm712, %v714, %v710
    %v716 = vmul.f32 1.0, %v715
    %v717 = vrcp.pop %v701
    %v718 = vmul.f32 %v701, %v717
    %v719 = vsub.f32 1.0, %v718
    %v720 = vmul.f32 %v717, %v719
    %v721 = vadd.f32 %v717, %v720
    %vm722 = vweird.f32 %v701
    %vm723 = vweird.f32 %v717
    %vm724 = vmor %vm722, %vm723
    %v725 = vsel %vm724, %v717, %v721
    %v726 = vand.u32 2147483647, %v701
    %vm727 = vcmp.eq.f32.partialorder %v726, 8.507059e+37
    %v728 = vand.u32 %v701, 2147483648
    %v729 = vor.u32 1.1754944e-38, %v728
    %v730 = vsel %vm727, %v729, %v725
    %v731 = vmul.f32 1.0, %v730
    %v732 = vmul.f32 %v716, %v690
    %v733 = vadd.f32 %v297, %v732
    %v734 = vtanh.pop %v733
    %v735 = vsub.f32 %v631, %v734
    %v736 = vmul.f32 %v731, %v735
    %v737 = vadd.f32 %v734, %v736
    %738 = vmatpush.msra.mxu0 %v97
    %739 = vmatpush.msra.mxu0 %v94
    %740 = vmatpush.msra.mxu0 %v91
    %741 = vmatpush.msra.mxu0 %v88
    %742 = vmatpush.msra.mxu0 %v85
    %743 = vmatpush.msra.mxu0 %v82
    %744 = vmatpush.msra.mxu0 %v79
    %745 = vmatpush.msra.mxu0 %v76
    %746 = vmatpush.msra.mxu0 %v73
    %747 = vmatpush.msra.mxu0 %v70
    %748 = vmatpush.msra.mxu0 %v67
    %749 = vmatpush.msra.mxu0 %v64
    %750 = vmatpush.msra.mxu0 %v61
    %751 = vmatpush.msra.mxu0 %v58
    %752 = vmatpush.msra.mxu0 %v55
    %753 = vmatpush.msra.mxu0 %v52
    %754 = vmatmul.f32.gmra.mxu0 %v737
    %v755 = vpop.f32.mrf.mxu0
    %v756 = vadd.f32 %v311, %v755
    %757 = vdwg.mxu0
    %758 = vmatpush.msra.mxu0 %v98
    %759 = vmatpush.msra.mxu0 %v95
    %760 = vmatpush.msra.mxu0 %v92
    %761 = vmatpush.msra.mxu0 %v89
    %762 = vmatpush.msra.mxu0 %v86
    %763 = vmatpush.msra.mxu0 %v83
    %764 = vmatpush.msra.mxu0 %v80
    %765 = vmatpush.msra.mxu0 %v77
    %766 = vmatpush.msra.mxu0 %v74
    %767 = vmatpush.msra.mxu0 %v71
    %768 = vmatpush.msra.mxu0 %v68
    %769 = vmatpush.msra.mxu0 %v65
    %770 = vmatpush.msra.mxu0 %v62
    %771 = vmatpush.msra.mxu0 %v59
    %772 = vmatpush.msra.mxu0 %v56
    %773 = vmatpush.msra.mxu0 %v53
    %774 = vmatmul.f32.gmra.mxu0 %v737
    %v775 = vpop.f32.mrf.mxu0
    %v776 = vadd.f32 %v312, %v775
    %777 = vdwg.mxu0
    %778 = vmatpush.msra.mxu0 %v99
    %779 = vmatpush.msra.mxu0 %v96
    %780 = vmatpush.msra.mxu0 %v93
    %781 = vmatpush.msra.mxu0 %v90
    %782 = vmatpush.msra.mxu0 %v87
    %783 = vmatpush.msra.mxu0 %v84
    %784 = vmatpush.msra.mxu0 %v81
    %785 = vmatpush.msra.mxu0 %v78
    %786 = vmatpush.msra.mxu0 %v75
    %787 = vmatpush.msra.mxu0 %v72
    %788 = vmatpush.msra.mxu0 %v69
    %789 = vmatpush.msra.mxu0 %v66
    %790 = vmatpush.msra.mxu0 %v63
    %791 = vmatpush.msra.mxu0 %v60
    %792 = vmatpush.msra.mxu0 %v57
    %793 = vmatpush.msra.mxu0 %v54
    %794 = vmatmul.f32.gmra.mxu0 %v737
    %v795 = vpop.f32.mrf.mxu0
    %v796 = vadd.f32 %v313, %v795
    %797 = vdwg.mxu0
    %v798 = vadd.f32 %v218, %v756
    %v799 = vadd.f32 %v259, %v776
    %v800 = vxor.u32 %v798, 2147483648
    %v801 = vxor.u32 %v799, 2147483648
    %v802 = vmul.f32 %v800, 1.442695
    %v803 = vpow.pop %v802
    %v804 = vmul.f32 %v801, 1.442695
    %v805 = vpow.pop %v804
    %v806 = vadd.f32 %v803, 1.0
    %v807 = vadd.f32 %v805, 1.0
    %v808 = vrcp.pop %v806
    %v809 = vmul.f32 %v806, %v808
    %v810 = vsub.f32 1.0, %v809
    %v811 = vmul.f32 %v808, %v810
    %v812 = vadd.f32 %v808, %v811
    %vm813 = vweird.f32 %v806
    %vm814 = vweird.f32 %v808
    %vm815 = vmor %vm813, %vm814
    %v816 = vsel %vm815, %v808, %v812
    %v817 = vand.u32 2147483647, %v806
    %vm818 = vcmp.eq.f32.partialorder %v817, 8.507059e+37
    %v819 = vand.u32 %v806, 2147483648
    %v820 = vor.u32 1.1754944e-38, %v819
    %v821 = vsel %vm818, %v820, %v816
    %v822 = vmul.f32 1.0, %v821
    %v823 = vrcp.pop %v807
    %v824 = vmul.f32 %v807, %v823
    %v825 = vsub.f32 1.0, %v824
    %v826 = vmul.f32 %v823, %v825
    %v827 = vadd.f32 %v823, %v826
    %vm828 = vweird.f32 %v807
    %vm829 = vweird.f32 %v823
    %vm830 = vmor %vm828, %vm829
    %v831 = vsel %vm830, %v823, %v827
    %v832 = vand.u32 2147483647, %v807
    %vm833 = vcmp.eq.f32.partialorder %v832, 8.507059e+37
    %v834 = vand.u32 %v807, 2147483648
    %v835 = vor.u32 1.1754944e-38, %v834
    %v836 = vsel %vm833, %v835, %v831
    %v837 = vmul.f32 1.0, %v836
    %v838 = vmul.f32 %v822, %v796
    %v839 = vadd.f32 %v300, %v838
    %v840 = vtanh.pop %v839
    %v841 = vsub.f32 %v737, %v840
    %v842 = vmul.f32 %v837, %v841
    %v843 = vadd.f32 %v840, %v842
    %844 = vmatpush.msra.mxu0 %v97
    %845 = vmatpush.msra.mxu0 %v94
    %846 = vmatpush.msra.mxu0 %v91
    %847 = vmatpush.msra.mxu0 %v88
    %848 = vmatpush.msra.mxu0 %v85
    %849 = vmatpush.msra.mxu0 %v82
    %850 = vmatpush.msra.mxu0 %v79
    %851 = vmatpush.msra.mxu0 %v76
    %852 = vmatpush.msra.mxu0 %v73
    %853 = vmatpush.msra.mxu0 %v70
    %854 = vmatpush.msra.mxu0 %v67
    %855 = vmatpush.msra.mxu0 %v64
    %856 = vmatpush.msra.mxu0 %v61
    %857 = vmatpush.msra.mxu0 %v58
    %858 = vmatpush.msra.mxu0 %v55
    %859 = vmatpush.msra.mxu0 %v52
    %860 = vmatmul.f32.gmra.mxu0 %v843
    %v861 = vpop.f32.mrf.mxu0
    %v862 = vadd.f32 %v311, %v861
    %863 = vdwg.mxu0
    %864 = vmatpush.msra.mxu0 %v98
    %865 = vmatpush.msra.mxu0 %v95
    %866 = vmatpush.msra.mxu0 %v92
    %867 = vmatpush.msra.mxu0 %v89
    %868 = vmatpush.msra.mxu0 %v86
    %869 = vmatpush.msra.mxu0 %v83
    %870 = vmatpush.msra.mxu0 %v80
    %871 = vmatpush.msra.mxu0 %v77
    %872 = vmatpush.msra.mxu0 %v74
    %873 = vmatpush.msra.mxu0 %v71
    %874 = vmatpush.msra.mxu0 %v68
    %875 = vmatpush.msra.mxu0 %v65
    %876 = vmatpush.msra.mxu0 %v62
    %877 = vmatpush.msra.mxu0 %v59
    %878 = vmatpush.msra.mxu0 %v56
    %879 = vmatpush.msra.mxu0 %v53
    %880 = vmatmul.f32.gmra.mxu0 %v843
    %v881 = vpop.f32.mrf.mxu0
    %v882 = vadd.f32 %v312, %v881
    %883 = vdwg.mxu0
    %884 = vmatpush.msra.mxu0 %v99
    %885 = vmatpush.msra.mxu0 %v96
    %886 = vmatpush.msra.mxu0 %v93
    %887 = vmatpush.msra.mxu0 %v90
    %888 = vmatpush.msra.mxu0 %v87
    %889 = vmatpush.msra.mxu0 %v84
    %890 = vmatpush.msra.mxu0 %v81
    %891 = vmatpush.msra.mxu0 %v78
    %892 = vmatpush.msra.mxu0 %v75
    %893 = vmatpush.msra.mxu0 %v72
    %894 = vmatpush.msra.mxu0 %v69
    %895 = vmatpush.msra.mxu0 %v66
    %896 = vmatpush.msra.mxu0 %v63
    %897 = vmatpush.msra.mxu0 %v60
    %898 = vmatpush.msra.mxu0 %v57
    %899 = vmatpush.msra.mxu0 %v54
    %900 = vmatmul.f32.gmra.mxu0 %v843
    %v901 = vpop.f32.mrf.mxu0
    %v902 = vadd.f32 %v313, %v901
    %903 = vdwg.mxu0
    %v904 = vadd.f32 %v221, %v862
    %v905 = vadd.f32 %v262, %v882
    %v906 = vxor.u32 %v904, 2147483648
    %v907 = vxor.u32 %v905, 2147483648
    %v908 = vmul.f32 %v906, 1.442695
    %v909 = vpow.pop %v908
    %v910 = vmul.f32 %v907, 1.442695
    %v911 = vpow.pop %v910
    %v912 = vadd.f32 %v909, 1.0
    %v913 = vadd.f32 %v911, 1.0
    %v914 = vrcp.pop %v912
    %v915 = vmul.f32 %v912, %v914
    %v916 = vsub.f32 1.0, %v915
    %v917 = vmul.f32 %v914, %v916
    %v918 = vadd.f32 %v914, %v917
    %vm919 = vweird.f32 %v912
    %vm920 = vweird.f32 %v914
    %vm921 = vmor %vm919, %vm920
    %v922 = vsel %vm921, %v914, %v918
    %v923 = vand.u32 2147483647, %v912
    %vm924 = vcmp.eq.f32.partialorder %v923, 8.507059e+37
    %v925 = vand.u32 %v912, 2147483648
    %v926 = vor.u32 1.1754944e-38, %v925
    %v927 = vsel %vm924, %v926, %v922
    %v928 = vmul.f32 1.0, %v927
    %v929 = vrcp.pop %v913
    %v930 = vmul.f32 %v913, %v929
    %v931 = vsub.f32 1.0, %v930
    %v932 = vmul.f32 %v929, %v931
    %v933 = vadd.f32 %v929, %v932
    %vm934 = vweird.f32 %v913
    %vm935 = vweird.f32 %v929
    %vm936 = vmor %vm934, %vm935
    %v937 = vsel %vm936, %v929, %v933
    %v938 = vand.u32 2147483647, %v913
    %vm939 = vcmp.eq.f32.partialorder %v938, 8.507059e+37
    %v940 = vand.u32 %v913, 2147483648
    %v941 = vor.u32 1.1754944e-38, %v940
    %v942 = vsel %vm939, %v941, %v937
    %v943 = vmul.f32 1.0, %v942
    %v944 = vmul.f32 %v928, %v902
    %v945 = vadd.f32 %v303, %v944
    %v946 = vtanh.pop %v945
    %v947 = vsub.f32 %v843, %v946
    %v948 = vmul.f32 %v943, %v947
    %v949 = vadd.f32 %v946, %v948
    %950 = vmatpush.msra.mxu0 %v97
    %951 = vmatpush.msra.mxu0 %v94
    %952 = vmatpush.msra.mxu0 %v91
    %953 = vmatpush.msra.mxu0 %v88
    %954 = vmatpush.msra.mxu0 %v85
    %955 = vmatpush.msra.mxu0 %v82
    %956 = vmatpush.msra.mxu0 %v79
    %957 = vmatpush.msra.mxu0 %v76
    %958 = vmatpush.msra.mxu0 %v73
    %959 = vmatpush.msra.mxu0 %v70
    %960 = vmatpush.msra.mxu0 %v67
    %961 = vmatpush.msra.mxu0 %v64
    %962 = vmatpush.msra.mxu0 %v61
    %963 = vmatpush.msra.mxu0 %v58
    %964 = vmatpush.msra.mxu0 %v55
    %965 = vmatpush.msra.mxu0 %v52
    %966 = vmatmul.f32.gmra.mxu0 %v949
    %v967 = vpop.f32.mrf.mxu0
    %v968 = vadd.f32 %v311, %v967
    %969 = vdwg.mxu0
    %970 = vmatpush.msra.mxu0 %v98
    %971 = vmatpush.msra.mxu0 %v95
    %972 = vmatpush.msra.mxu0 %v92
    %973 = vmatpush.msra.mxu0 %v89
    %974 = vmatpush.msra.mxu0 %v86
    %975 = vmatpush.msra.mxu0 %v83
    %976 = vmatpush.msra.mxu0 %v80
    %977 = vmatpush.msra.mxu0 %v77
    %978 = vmatpush.msra.mxu0 %v74
    %979 = vmatpush.msra.mxu0 %v71
    %980 = vmatpush.msra.mxu0 %v68
    %981 = vmatpush.msra.mxu0 %v65
    %982 = vmatpush.msra.mxu0 %v62
    %983 = vmatpush.msra.mxu0 %v59
    %984 = vmatpush.msra.mxu0 %v56
    %985 = vmatpush.msra.mxu0 %v53
    %986 = vmatmul.f32.gmra.mxu0 %v949
    %v987 = vpop.f32.mrf.mxu0
    %v988 = vadd.f32 %v312, %v987
    %989 = vdwg.mxu0
    %990 = vmatpush.msra.mxu0 %v99
    %991 = vmatpush.msra.mxu0 %v96
    %992 = vmatpush.msra.mxu0 %v93
    %993 = vmatpush.msra.mxu0 %v90
    %994 = vmatpush.msra.mxu0 %v87
    %995 = vmatpush.msra.mxu0 %v84
    %996 = vmatpush.msra.mxu0 %v81
    %997 = vmatpush.msra.mxu0 %v78
    %998 = vmatpush.msra.mxu0 %v75
    %999 = vmatpush.msra.mxu0 %v72
    %1000 = vmatpush.msra.mxu0 %v69
    %1001 = vmatpush.msra.mxu0 %v66
    %1002 = vmatpush.msra.mxu0 %v63
    %1003 = vmatpush.msra.mxu0 %v60
    %1004 = vmatpush.msra.mxu0 %v57
    %1005 = vmatpush.msra.mxu0 %v54
    %1006 = vmatmul.f32.gmra.mxu0 %v949
    %v1007 = vpop.f32.mrf.mxu0
    %v1008 = vadd.f32 %v313, %v1007
    %1009 = vdwg.mxu0
    %v1010 = vadd.f32 %v224, %v968
    %v1011 = vadd.f32 %v265, %v988
    %v1012 = vxor.u32 %v1010, 2147483648
    %v1013 = vxor.u32 %v1011, 2147483648
    %v1014 = vmul.f32 %v1012, 1.442695
    %v1015 = vpow.pop %v1014
    %v1016 = vmul.f32 %v1013, 1.442695
    %v1017 = vpow.pop %v1016
    %v1018 = vadd.f32 %v1015, 1.0
    %v1019 = vadd.f32 %v1017, 1.0
    %v1020 = vrcp.pop %v1018
    %v1021 = vmul.f32 %v1018, %v1020
    %v1022 = vsub.f32 1.0, %v1021
    %v1023 = vmul.f32 %v1020, %v1022
    %v1024 = vadd.f32 %v1020, %v1023
    %vm1025 = vweird.f32 %v1018
    %vm1026 = vweird.f32 %v1020
    %vm1027 = vmor %vm1025, %vm1026
    %v1028 = vsel %vm1027, %v1020, %v1024
    %v1029 = vand.u32 2147483647, %v1018
    %vm1030 = vcmp.eq.f32.partialorder %v1029, 8.507059e+37
    %v1031 = vand.u32 %v1018, 2147483648
    %v1032 = vor.u32 1.1754944e-38, %v1031
    %v1033 = vsel %vm1030, %v1032, %v1028
    %v1034 = vmul.f32 1.0, %v1033
    %v1035 = vrcp.pop %v1019
    %v1036 = vmul.f32 %v1019, %v1035
    %v1037 = vsub.f32 1.0, %v1036
    %v1038 = vmul.f32 %v1035, %v1037
    %v1039 = vadd.f32 %v1035, %v1038
    %vm1040 = vweird.f32 %v1019
    %vm1041 = vweird.f32 %v1035
    %vm1042 = vmor %vm1040, %vm1041
    %v1043 = vsel %vm1042, %v1035, %v1039
    %v1044 = vand.u32 2147483647, %v1019
    %vm1045 = vcmp.eq.f32.partialorder %v1044, 8.507059e+37
    %v1046 = vand.u32 %v1019, 2147483648
    %v1047 = vor.u32 1.1754944e-38, %v1046
    %v1048 = vsel %vm1045, %v1047, %v1043
    %v1049 = vmul.f32 1.0, %v1048
    %v1050 = vmul.f32 %v1034, %v1008
    %v1051 = vadd.f32 %v306, %v1050
    %v1052 = vtanh.pop %v1051
    %v1053 = vsub.f32 %v949, %v1052
    %v1054 = vmul.f32 %v1049, %v1053
    %v1055 = vadd.f32 %v1052, %v1054
    %1056 = vmatpush.msra.mxu0 %v97
    %1057 = vmatpush.msra.mxu0 %v94
    %1058 = vmatpush.msra.mxu0 %v91
    %1059 = vmatpush.msra.mxu0 %v88
    %1060 = vmatpush.msra.mxu0 %v85
    %1061 = vmatpush.msra.mxu0 %v82
    %1062 = vmatpush.msra.mxu0 %v79
    %1063 = vmatpush.msra.mxu0 %v76
    %1064 = vmatpush.msra.mxu0 %v73
    %1065 = vmatpush.msra.mxu0 %v70
    %1066 = vmatpush.msra.mxu0 %v67
    %1067 = vmatpush.msra.mxu0 %v64
    %1068 = vmatpush.msra.mxu0 %v61
    %1069 = vmatpush.msra.mxu0 %v58
    %1070 = vmatpush.msra.mxu0 %v55
    %1071 = vmatpush.msra.mxu0 %v52
    %1072 = vmatmul.f32.gmra.mxu0 %v1055
    %v1073 = vpop.f32.mrf.mxu0
    %v1074 = vadd.f32 %v311, %v1073
    %1075 = vdwg.mxu0
    %1076 = vmatpush.msra.mxu0 %v98
    %1077 = vmatpush.msra.mxu0 %v95
    %1078 = vmatpush.msra.mxu0 %v92
    %1079 = vmatpush.msra.mxu0 %v89
    %1080 = vmatpush.msra.mxu0 %v86
    %1081 = vmatpush.msra.mxu0 %v83
    %1082 = vmatpush.msra.mxu0 %v80
    %1083 = vmatpush.msra.mxu0 %v77
    %1084 = vmatpush.msra.mxu0 %v74
    %1085 = vmatpush.msra.mxu0 %v71
    %1086 = vmatpush.msra.mxu0 %v68
    %1087 = vmatpush.msra.mxu0 %v65
    %1088 = vmatpush.msra.mxu0 %v62
    %1089 = vmatpush.msra.mxu0 %v59
    %1090 = vmatpush.msra.mxu0 %v56
    %1091 = vmatpush.msra.mxu0 %v53
    %1092 = vmatmul.f32.gmra.mxu0 %v1055
    %v1093 = vpop.f32.mrf.mxu0
    %v1094 = vadd.f32 %v312, %v1093
    %1095 = vdwg.mxu0
    %1096 = vmatpush.msra.mxu0 %v99
    %1097 = vmatpush.msra.mxu0 %v96
    %1098 = vmatpush.msra.mxu0 %v93
    %1099 = vmatpush.msra.mxu0 %v90
    %1100 = vmatpush.msra.mxu0 %v87
    %1101 = vmatpush.msra.mxu0 %v84
    %1102 = vmatpush.msra.mxu0 %v81
    %1103 = vmatpush.msra.mxu0 %v78
    %1104 = vmatpush.msra.mxu0 %v75
    %1105 = vmatpush.msra.mxu0 %v72
    %1106 = vmatpush.msra.mxu0 %v69
    %1107 = vmatpush.msra.mxu0 %v66
    %1108 = vmatpush.msra.mxu0 %v63
    %1109 = vmatpush.msra.mxu0 %v60
    %1110 = vmatpush.msra.mxu0 %v57
    %1111 = vmatpush.msra.mxu0 %v54
    %1112 = vmatmul.f32.gmra.mxu0 %v1055
    %v1113 = vpop.f32.mrf.mxu0
    %v1114 = vadd.f32 %v313, %v1113
    %1115 = vdwg.mxu0
    %v1116 = vadd.f32 %v227, %v1074
    %v1117 = vadd.f32 %v268, %v1094
    %v1118 = vxor.u32 %v1116, 2147483648
    %v1119 = vxor.u32 %v1117, 2147483648
    %v1120 = vmul.f32 %v1118, 1.442695
    %v1121 = vpow.pop %v1120
    %v1122 = vmul.f32 %v1119, 1.442695
    %v1123 = vpow.pop %v1122
    %v1124 = vadd.f32 %v1121, 1.0
    %v1125 = vadd.f32 %v1123, 1.0
    %v1126 = vrcp.pop %v1124
    %v1127 = vmul.f32 %v1124, %v1126
    %v1128 = vsub.f32 1.0, %v1127
    %v1129 = vmul.f32 %v1126, %v1128
    %v1130 = vadd.f32 %v1126, %v1129
    %vm1131 = vweird.f32 %v1124
    %vm1132 = vweird.f32 %v1126
    %vm1133 = vmor %vm1131, %vm1132
    %v1134 = vsel %vm1133, %v1126, %v1130
    %v1135 = vand.u32 2147483647, %v1124
    %vm1136 = vcmp.eq.f32.partialorder %v1135, 8.507059e+37
    %v1137 = vand.u32 %v1124, 2147483648
    %v1138 = vor.u32 1.1754944e-38, %v1137
    %v1139 = vsel %vm1136, %v1138, %v1134
    %v1140 = vmul.f32 1.0, %v1139
    %v1141 = vrcp.pop %v1125
    %v1142 = vmul.f32 %v1125, %v1141
    %v1143 = vsub.f32 1.0, %v1142
    %v1144 = vmul.f32 %v1141, %v1143
    %v1145 = vadd.f32 %v1141, %v1144
    %vm1146 = vweird.f32 %v1125
    %vm1147 = vweird.f32 %v1141
    %vm1148 = vmor %vm1146, %vm1147
    %v1149 = vsel %vm1148, %v1141, %v1145
    %v1150 = vand.u32 2147483647, %v1125
    %vm1151 = vcmp.eq.f32.partialorder %v1150, 8.507059e+37
    %v1152 = vand.u32 %v1125, 2147483648
    %v1153 = vor.u32 1.1754944e-38, %v1152
    %v1154 = vsel %vm1151, %v1153, %v1149
    %v1155 = vmul.f32 1.0, %v1154
    %v1156 = vmul.f32 %v1140, %v1114
    %v1157 = vadd.f32 %v309, %v1156
    %v1158 = vtanh.pop %v1157
    %v1159 = vsub.f32 %v1055, %v1158
    %v1160 = vmul.f32 %v1155, %v1159
    %v1161 = vadd.f32 %v1158, %v1160
    %v1162 = vperm.slane %v49, 2
    %1163 = vmatpush.msra.mxu0 %v118
    %1164 = vmatpush.msra.mxu0 %v117
    %1165 = vmatpush.msra.mxu0 %v116
    %1166 = vmatpush.msra.mxu0 %v115
    %1167 = vmatpush.msra.mxu0 %v114
    %1168 = vmatpush.msra.mxu0 %v113
    %1169 = vmatpush.msra.mxu0 %v112
    %1170 = vmatpush.msra.mxu0 %v111
    %1171 = vmatpush.msra.mxu0 %v110
    %1172 = vmatpush.msra.mxu0 %v109
    %1173 = vmatpush.msra.mxu0 %v108
    %1174 = vmatpush.msra.mxu0 %v107
    %1175 = vmatpush.msra.mxu0 %v106
    %1176 = vmatpush.msra.mxu0 %v105
    %1177 = vmatpush.msra.mxu0 %v104
    %1178 = vmatpush.msra.mxu0 %v103
    %1179 = vmatmul.f32.gmra.mxu0 %v1161
    %v1180 = vpop.f32.mrf.mxu0
    %v1181 = vadd.f32 %v1162, %v1180
    %1182 = vdwg.mxu0
    %v1183 = vmax.f32 %v1181, 0.0
    %v1184 = vperm.slane %v49, 3
    %1185 = vmatpush.msra.mxu0 %v134
    %1186 = vmatpush.msra.mxu0 %v133
    %1187 = vmatpush.msra.mxu0 %v132
    %1188 = vmatpush.msra.mxu0 %v131
    %1189 = vmatpush.msra.mxu0 %v130
    %1190 = vmatpush.msra.mxu0 %v129
    %1191 = vmatpush.msra.mxu0 %v128
    %1192 = vmatpush.msra.mxu0 %v127
    %1193 = vmatpush.msra.mxu0 %v126
    %1194 = vmatpush.msra.mxu0 %v125
    %1195 = vmatpush.msra.mxu0 %v124
    %1196 = vmatpush.msra.mxu0 %v123
    %1197 = vmatpush.msra.mxu0 %v122
    %1198 = vmatpush.msra.mxu0 %v121
    %1199 = vmatpush.msra.mxu0 %v120
    %1200 = vmatpush.msra.mxu0 %v119
    %1201 = vmatmul.f32.gmra.mxu0 %v1183
    %v1202 = vpop.f32.mrf.mxu0
    %v1203 = vadd.f32 %v1184, %v1202
    %1204 = vdwg.mxu0
    %v1205 = vmax.f32 %v1203, 0.0
    %v1206 = vperm.slane %v49, 4
    %v1207 = vmul.f32 %v1205, %v1206
    %1208 = vadd.xlane.f32.xlu0 %v1207
    %v1209 = vpop.xlane.xlu0 %1208
    %v1210 = vperm.slane %v49, 5
    %v1211 = vadd.f32 %v1209, %v1210
    %v1212 = vxor.u32 %v1211, 2147483648
    %v1213 = vmul.f32 %v1212, 1.442695
    %v1214 = vpow.pop %v1213
    %v1215 = vadd.f32 %v1214, 1.0
    %v1216 = vrcp.pop %v1215
    %v1217 = vmul.f32 %v1215, %v1216
    %v1218 = vsub.f32 1.0, %v1217
    %v1219 = vmul.f32 %v1216, %v1218
    %v1220 = vadd.f32 %v1216, %v1219
    %vm1221 = vweird.f32 %v1215
    %vm1222 = vweird.f32 %v1216
    %vm1223 = vmor %vm1221, %vm1222
    %v1224 = vsel %vm1223, %v1216, %v1220
    %v1225 = vand.u32 2147483647, %v1215
    %vm1226 = vcmp.eq.f32.partialorder %v1225, 8.507059e+37
    %v1227 = vand.u32 %v1215, 2147483648
    %v1228 = vor.u32 1.1754944e-38, %v1227
    %v1229 = vsel %vm1226, %v1228, %v1224
    %v1230 = vmul.f32 1.0, %v1229
    %1232 = vset.pattern.permute.xlu0 0
    %1233 = vperm.xlu0 %1232, %v1230
    %v1234 = vpop.permute.xlu0 %1233
    %1236 = vst [vmem:[%s4] sm:$0xff] %v1234
    // Predicated region
    $region26: #{gru_mean_forward.1} parent=1 // pred_check
      _
    $region27: #{gru_mean_forward.1} parent=1 // pred_check_branch
      %1238 = sbr.rel (0) target = $region29
    $region28: #{gru_mean_forward.1} parent=1 // pred_region
      _
    $region29: #{gru_mean_forward.1} parent=1 // pred_fallthru
      _
    // Predicated region
    $region30: #{gru_mean_forward.1} parent=1 // pred_check
      _
    $region31: #{gru_mean_forward.1} parent=1 // pred_check_branch
      %1240 = sbr.rel (0) target = $region33
    $region32: #{gru_mean_forward.1} parent=1 // pred_region
      _
    $region33: #{gru_mean_forward.1} parent=1 // pred_fallthru
      _
    %1241 = vsyncpa [#allocation3], 1
    %1242 = vsyncpa [#allocation5], 1

</llo_original>
